<compile_context>
chip_gen: v7x
topology: tpu7x:2x2x1
jax: 0.10.0
libtpu: 0.0.40
codegen_flags: <defaults>
</compile_context>

<pallas_src>
import functools

import jax
import jax.numpy as jnp
from jax.experimental import pallas as pl
from jax.experimental.pallas import tpu as pltpu

_LANE = 128


def _single_conv_kernel(x_ref, w_ref, b_ref, o_ref, acc_ref, *, K, compute_dtype):
    # x_ref:   (TH+K-1, W, K*Cin)  halo'd, kw-folded input tile
    # w_ref:   (K, K*Cin, Cout_p)  BN-folded weights, one (K*Cin, Cout_p) slab per kh tap
    # b_ref:   (1, Cout_p)         BN-folded bias
    # o_ref:   (TH, W, Cout_p)     lane-dense output tile (Cout_p % 128 == 0)
    # acc_ref: (TH*W, Cout_p) f32 VMEM scratch accumulator
    TH, W, Cout_p = o_ref.shape
    KCin = x_ref.shape[-1]

    for kh in range(K):  # static unroll: K (=3) fat matmuls, contraction depth K*Cin
        patch = x_ref[kh:kh + TH, :, :].reshape(TH * W, KCin)
        if compute_dtype is not None:
            patch = patch.astype(compute_dtype)
        contrib = jnp.dot(patch, w_ref[kh], preferred_element_type=jnp.float32)
        if kh == 0:
            acc_ref[...] = contrib
        else:
            acc_ref[...] += contrib

    # f32 epilogue: bias add + ReLU, then one lane-dense store.
    y = jnp.maximum(acc_ref[...] + b_ref[...], 0.0)
    o_ref[...] = y.reshape(TH, W, Cout_p).astype(o_ref.dtype)


def _round_up(x, m):
    return ((x + m - 1) // m) * m


def _pick_block_h(H, W, kcin, cout_p, halo, budget_bytes=6 * 1024 * 1024):
    """Largest divisor of H whose double-buffered tile footprint fits the budget.

    Budget is conservative so double buffering survives v7x's 64 MiB VMEM.
    """
    best = 1
    for th in range(1, H + 1):
        if H % th:
            continue
        in_b = (th + halo) * W * kcin * 4
        out_b = th * W * cout_p * 4
        acc_b = th * W * cout_p * 4
        if 2 * (in_b + out_b) + acc_b <= budget_bytes:
            best = th
    return best


def single_conv_forward(x_nchw, w_oihw, conv_bias, gamma, beta,
                        running_mean, running_var, eps=1e-5,
                        *, block_h=None, compute_dtype=None):
    """Conv2d(KxK, stride=1, pad=K//2) -> BatchNorm2d(eval) -> ReLU.  NCHW in / NCHW out."""
    N, Cin, H, W = x_nchw.shape
    Cout, _, K, _ = w_oihw.shape
    pad = K // 2
    halo = K - 1

    # ---- Fold BatchNorm (eval) into the conv weights + one per-channel bias.
    scale = gamma / jnp.sqrt(running_var + eps)                     # (Cout,)
    w_eff = w_oihw * scale[:, None, None, None]                     # (Cout,Cin,K,K)
    bias_eff = beta + scale * (conv_bias - running_mean)            # (Cout,)

    # ---- Lane-dense output channels.
    Cout_p = _round_up(Cout, _LANE)
    KCin = K * Cin

    # ---- NCHW -> NHWC, zero-pad spatially, fold the kw taps into channels:
    #      x_kw[n, h, w, kw*Cin + c] = x_pad[n, h, w + kw, c]
    x_nhwc = jnp.transpose(x_nchw, (0, 2, 3, 1)).astype(jnp.float32)
    x_pad = jnp.pad(x_nhwc, ((0, 0), (pad, pad), (pad, pad), (0, 0)))
    x_kw = jnp.stack([x_pad[:, :, kw:kw + W, :] for kw in range(K)], axis=3)
    x_kw = x_kw.reshape(N, H + halo, W, KCin)

    # ---- Pick the H tile and pre-stride into overlapping (halo'd) row tiles.
    if block_h is None:
        block_h = _pick_block_h(H, W, KCin, Cout_p, halo)
    else:
        block_h = max(1, min(block_h, H))
        while H % block_h:
            block_h -= 1
    TH = block_h
    n_t = H // TH
    x_tiles = jnp.stack(
        [x_kw[:, t * TH: t * TH + TH + halo] for t in range(n_t)],
        axis=1)                                                     # (N, n_t, TH+halo, W, KCin)

    # ---- Weights: (Cout,Cin,K,K) -> (K, K*Cin, Cout_p); bias -> (1, Cout_p).
    w_t = jnp.transpose(w_eff, (2, 3, 1, 0)).reshape(K, KCin, Cout)  # [kh, kw*Cin+c, o]
    w_t = jnp.pad(w_t, ((0, 0), (0, 0), (0, Cout_p - Cout)))
    w_t = w_t.astype(compute_dtype if compute_dtype is not None else jnp.float32)
    bias_p = jnp.pad(bias_eff, (0, Cout_p - Cout)).reshape(1, Cout_p).astype(jnp.float32)

    # ---- Explicit VMEM budget from the tile footprint (default scoped limit is only
    #      16/32 MiB; v7x physical VMEM is 64 MiB, so cap there).
    in_b = (TH + halo) * W * KCin * 4
    out_b = TH * W * Cout_p * 4
    w_b = K * KCin * Cout_p * w_t.dtype.itemsize
    acc_b = TH * W * Cout_p * 4
    vmem_limit = int(min(max(2 * (in_b + out_b + w_b + Cout_p * 4) + acc_b + (8 << 20),
                             32 << 20),
                         64 << 20))

    kernel = functools.partial(_single_conv_kernel, K=K, compute_dtype=compute_dtype)

    out_nhwc = pl.pallas_call(
        kernel,
        out_shape=jax.ShapeDtypeStruct((N, H, W, Cout_p), x_nchw.dtype),
        grid_spec=pltpu.PrefetchScalarGridSpec(
            num_scalar_prefetch=0,
            grid=(N, n_t),
            in_specs=[
                pl.BlockSpec((None, None, TH + halo, W, KCin),
                             lambda n, t: (n, t, 0, 0, 0)),
                pl.BlockSpec((K, KCin, Cout_p), lambda n, t: (0, 0, 0)),
                pl.BlockSpec((1, Cout_p), lambda n, t: (0, 0)),
            ],
            out_specs=pl.BlockSpec((None, TH, W, Cout_p),
                                   lambda n, t: (n, t, 0, 0)),
            scratch_shapes=[pltpu.VMEM((TH * W, Cout_p), jnp.float32)],
        ),
        compiler_params=pltpu.CompilerParams(
            dimension_semantics=("parallel", "parallel"),
            vmem_limit_bytes=vmem_limit),
    )(x_tiles, w_t, bias_p)

    # ---- Drop channel padding, NHWC -> NCHW to match PyTorch.
    return jnp.transpose(out_nhwc[..., :Cout], (0, 3, 1, 2))


def _reference(x_nchw, w_oihw, conv_bias, gamma, beta, mean, var, eps=1e-5):
    y = jax.lax.conv_general_dilated(
        x_nchw, w_oihw, window_strides=(1, 1),
        padding=((1, 1), (1, 1)),
        dimension_numbers=("NCHW", "OIHW", "NCHW"))
    y = y + conv_bias[None, :, None, None]
    y = (y - mean[None, :, None, None]) / jnp.sqrt(var[None, :, None, None] + eps)
    y = y * gamma[None, :, None, None] + beta[None, :, None, None]
    return jnp.maximum(y, 0.0)


if __name__ == "__main__":
    key = jax.random.PRNGKey(0)
    k_x, k_w, k_b, k_g, k_be, k_m, k_v = jax.random.split(key, 7)

    N, Cin, H, W = 2, 4, 16, 16
    Cout, K = 8, 3

    x = jax.random.normal(k_x, (N, Cin, H, W), dtype=jnp.float32)
    w = jax.random.normal(k_w, (Cout, Cin, K, K), dtype=jnp.float32) * 0.1
    conv_bias = jax.random.normal(k_b, (Cout,), dtype=jnp.float32) * 0.1
    gamma = 1.0 + 0.1 * jax.random.normal(k_g, (Cout,), dtype=jnp.float32)
    beta = 0.1 * jax.random.normal(k_be, (Cout,), dtype=jnp.float32)
    running_mean = 0.1 * jax.random.normal(k_m, (Cout,), dtype=jnp.float32)
    running_var = jnp.abs(jax.random.normal(k_v, (Cout,), dtype=jnp.float32)) + 0.5

    ref = _reference(x, w, conv_bias, gamma, beta, running_mean, running_var)

    # Auto-picked H tile.
    out = single_conv_forward(x, w, conv_bias, gamma, beta, running_mean, running_var)
    out = jax.block_until_ready(out)
    assert out.shape == (N, Cout, H, W)
    assert jnp.allclose(out, ref, atol=1e-4, rtol=1e-4), "mismatch vs reference (auto tile)"

    # Explicit multi-tile path — exercises the H-halo tiling (grid = (N, 2)).
    out_tiled = single_conv_forward(x, w, conv_bias, gamma, beta,
                                    running_mean, running_var, block_h=8)
    out_tiled = jax.block_until_ready(out_tiled)
    assert jnp.allclose(out_tiled, ref, atol=1e-4, rtol=1e-4), "mismatch vs reference (block_h=8)"

    print("KERNEL_OK")
</pallas_src>

<mosaic_0001>
module attributes {stable_mosaic.version = 11 : i64} {
  func.func @_single_conv_kernel(%arg0: i32, %arg1: i32, %arg2: memref<1x1x18x16x12xf32, #tpu.memory_space<vmem>>, %arg3: memref<3x12x128xf32, #tpu.memory_space<vmem>>, %arg4: memref<1x128xf32, #tpu.memory_space<vmem>>, %arg5: memref<1x16x16x128xf32, #tpu.memory_space<vmem>>, %arg6: memref<256x128xf32, #tpu.memory_space<vmem>>) attributes {dimension_semantics = [#tpu.dimension_semantics<parallel>, #tpu.dimension_semantics<parallel>], iteration_bounds = array<i64: 2, 1>, scalar_prefetch = 0 : i64, scratch_operands = 1 : i64, tpu.core_type = #tpu.core_type<tc>, window_params = [{transform_indices = @transform_0, window_bounds = array<i64: 1, 1, 18, 16, 12>}, {pipeline_mode = #tpu.pipeline_mode<synchronous>, transform_indices = @transform_1, window_bounds = array<i64: 3, 12, 128>}, {pipeline_mode = #tpu.pipeline_mode<synchronous>, transform_indices = @transform_2, window_bounds = array<i64: 1, 128>}, {transform_indices = @transform_3, window_bounds = array<i64: 1, 16, 16, 128>}]} {
    %c0 = arith.constant 0 : index
    %c0_0 = arith.constant 0 : index
    %c0_1 = arith.constant 0 : index
    %c0_2 = arith.constant 0 : index
    %c0_3 = arith.constant 0 : index
    %0 = vector.load %arg2[%c0, %c0_0, %c0_1, %c0_2, %c0_3] : memref<1x1x18x16x12xf32, #tpu.memory_space<vmem>>, vector<1x1x16x16x12xf32>
    %1 = vector.shape_cast %0 : vector<1x1x16x16x12xf32> to vector<16x16x12xf32>
    %2 = vector.shape_cast %1 : vector<16x16x12xf32> to vector<256x12xf32>
    %c0_4 = arith.constant 0 : index
    %c0_5 = arith.constant 0 : index
    %c0_6 = arith.constant 0 : index
    %3 = vector.load %arg3[%c0_4, %c0_5, %c0_6] : memref<3x12x128xf32, #tpu.memory_space<vmem>>, vector<1x12x128xf32>
    %4 = vector.shape_cast %3 : vector<1x12x128xf32> to vector<12x128xf32>
    %cst = arith.constant dense<0.000000e+00> : vector<256x128xf32>
    %5 = tpu.matmul %2, %4, %cst {dimension_numbers = #tpu.dot_dimension_numbers<[1], [0], [0], [1], [0, 0, 1, 1], [], []>} : vector<256x12xf32>, vector<12x128xf32>, vector<256x128xf32> -> vector<256x128xf32>
    %c0_7 = arith.constant 0 : index
    %c0_8 = arith.constant 0 : index
    %6 = vector.load %arg6[%c0_7, %c0_8] : memref<256x128xf32, #tpu.memory_space<vmem>>, vector<256x128xf32>
    tpu.vector_store %arg6[%c0_7, %c0_8], %5 {strides = array<i32>} : memref<256x128xf32, #tpu.memory_space<vmem>>, vector<256x128xf32>,
    %c0_9 = arith.constant 0 : index
    %c0_10 = arith.constant 0 : index
    %c1 = arith.constant 1 : index
    %c0_11 = arith.constant 0 : index
    %c0_12 = arith.constant 0 : index
    %7 = vector.load %arg2[%c0_9, %c0_10, %c1, %c0_11, %c0_12] : memref<1x1x18x16x12xf32, #tpu.memory_space<vmem>>, vector<1x1x16x16x12xf32>
    %8 = vector.shape_cast %7 : vector<1x1x16x16x12xf32> to vector<16x16x12xf32>
    %9 = vector.shape_cast %8 : vector<16x16x12xf32> to vector<256x12xf32>
    %c1_13 = arith.constant 1 : index
    %c0_14 = arith.constant 0 : index
    %c0_15 = arith.constant 0 : index
    %10 = vector.load %arg3[%c1_13, %c0_14, %c0_15] : memref<3x12x128xf32, #tpu.memory_space<vmem>>, vector<1x12x128xf32>
    %11 = vector.shape_cast %10 : vector<1x12x128xf32> to vector<12x128xf32>
    %cst_16 = arith.constant dense<0.000000e+00> : vector<256x128xf32>
    %12 = tpu.matmul %9, %11, %cst_16 {dimension_numbers = #tpu.dot_dimension_numbers<[1], [0], [0], [1], [0, 0, 1, 1], [], []>} : vector<256x12xf32>, vector<12x128xf32>, vector<256x128xf32> -> vector<256x128xf32>
    %c0_17 = arith.constant 0 : index
    %c0_18 = arith.constant 0 : index
    %13 = vector.load %arg6[%c0_17, %c0_18] : memref<256x128xf32, #tpu.memory_space<vmem>>, vector<256x128xf32>
    %14 = arith.addf %13, %12 : vector<256x128xf32>
    %c0_19 = arith.constant 0 : index
    %c0_20 = arith.constant 0 : index
    %15 = vector.load %arg6[%c0_19, %c0_20] : memref<256x128xf32, #tpu.memory_space<vmem>>, vector<256x128xf32>
    tpu.vector_store %arg6[%c0_19, %c0_20], %14 {strides = array<i32>} : memref<256x128xf32, #tpu.memory_space<vmem>>, vector<256x128xf32>,
    %c0_21 = arith.constant 0 : index
    %c0_22 = arith.constant 0 : index
    %c2 = arith.constant 2 : index
    %c0_23 = arith.constant 0 : index
    %c0_24 = arith.constant 0 : index
    %16 = vector.load %arg2[%c0_21, %c0_22, %c2, %c0_23, %c0_24] : memref<1x1x18x16x12xf32, #tpu.memory_space<vmem>>, vector<1x1x16x16x12xf32>
    %17 = vector.shape_cast %16 : vector<1x1x16x16x12xf32> to vector<16x16x12xf32>
    %18 = vector.shape_cast %17 : vector<16x16x12xf32> to vector<256x12xf32>
    %c2_25 = arith.constant 2 : index
    %c0_26 = arith.constant 0 : index
    %c0_27 = arith.constant 0 : index
    %19 = vector.load %arg3[%c2_25, %c0_26, %c0_27] : memref<3x12x128xf32, #tpu.memory_space<vmem>>, vector<1x12x128xf32>
    %20 = vector.shape_cast %19 : vector<1x12x128xf32> to vector<12x128xf32>
    %cst_28 = arith.constant dense<0.000000e+00> : vector<256x128xf32>
    %21 = tpu.matmul %18, %20, %cst_28 {dimension_numbers = #tpu.dot_dimension_numbers<[1], [0], [0], [1], [0, 0, 1, 1], [], []>} : vector<256x12xf32>, vector<12x128xf32>, vector<256x128xf32> -> vector<256x128xf32>
    %c0_29 = arith.constant 0 : index
    %c0_30 = arith.constant 0 : index
    %22 = vector.load %arg6[%c0_29, %c0_30] : memref<256x128xf32, #tpu.memory_space<vmem>>, vector<256x128xf32>
    %23 = arith.addf %22, %21 : vector<256x128xf32>
    %c0_31 = arith.constant 0 : index
    %c0_32 = arith.constant 0 : index
    %24 = vector.load %arg6[%c0_31, %c0_32] : memref<256x128xf32, #tpu.memory_space<vmem>>, vector<256x128xf32>
    tpu.vector_store %arg6[%c0_31, %c0_32], %23 {strides = array<i32>} : memref<256x128xf32, #tpu.memory_space<vmem>>, vector<256x128xf32>,
    %c0_33 = arith.constant 0 : index
    %c0_34 = arith.constant 0 : index
    %25 = vector.load %arg6[%c0_33, %c0_34] : memref<256x128xf32, #tpu.memory_space<vmem>>, vector<256x128xf32>
    %c0_35 = arith.constant 0 : index
    %c0_36 = arith.constant 0 : index
    %26 = vector.load %arg4[%c0_35, %c0_36] : memref<1x128xf32, #tpu.memory_space<vmem>>, vector<1x128xf32>
    %27 = vector.broadcast %26 : vector<1x128xf32> to vector<256x128xf32>
    %28 = arith.addf %25, %27 : vector<256x128xf32>
    %cst_37 = arith.constant 0.000000e+00 : f32
    %29 = vector.broadcast %cst_37 : f32 to vector<256x128xf32>
    %30 = arith.maximumf %28, %29 : vector<256x128xf32>
    %31 = vector.shape_cast %30 : vector<256x128xf32> to vector<16x16x128xf32>
    %c0_38 = arith.constant 0 : index
    %c0_39 = arith.constant 0 : index
    %c0_40 = arith.constant 0 : index
    %c0_41 = arith.constant 0 : index
    %32 = vector.load %arg5[%c0_38, %c0_39, %c0_40, %c0_41] : memref<1x16x16x128xf32, #tpu.memory_space<vmem>>, vector<1x16x16x128xf32>
    %33 = vector.shape_cast %32 : vector<1x16x16x128xf32> to vector<16x16x128xf32>
    %34 = vector.shape_cast %31 : vector<16x16x128xf32> to vector<1x16x16x128xf32>
    tpu.vector_store %arg5[%c0_38, %c0_39, %c0_40, %c0_41], %34 {strides = array<i32>} : memref<1x16x16x128xf32, #tpu.memory_space<vmem>>, vector<1x16x16x128xf32>,
    return
  }
  func.func @transform_0(%arg0: i32, %arg1: i32) -> (i32, i32, i32, i32, i32) {
    %c0_i32 = arith.constant 0 : i32
    %c0_i32_0 = arith.constant 0 : i32
    %c0_i32_1 = arith.constant 0 : i32
    %c0_i32_2 = arith.constant 0 : i32
    return %arg0, %arg1, %c0_i32, %c0_i32_0, %c0_i32_1 : i32, i32, i32, i32, i32
  }
  func.func @transform_1(%arg0: i32, %arg1: i32) -> (i32, i32, i32) {
    %c0_i32 = arith.constant 0 : i32
    %c0_i32_0 = arith.constant 0 : i32
    %c0_i32_1 = arith.constant 0 : i32
    %c0_i32_2 = arith.constant 0 : i32
    return %c0_i32, %c0_i32_0, %c0_i32_1 : i32, i32, i32
  }
  func.func @transform_2(%arg0: i32, %arg1: i32) -> (i32, i32) {
    %c0_i32 = arith.constant 0 : i32
    %c0_i32_0 = arith.constant 0 : i32
    %c0_i32_1 = arith.constant 0 : i32
    return %c0_i32, %c0_i32_0 : i32, i32
  }
  func.func @transform_3(%arg0: i32, %arg1: i32) -> (i32, i32, i32, i32) {
    %c0_i32 = arith.constant 0 : i32
    %c0_i32_0 = arith.constant 0 : i32
    %c0_i32_1 = arith.constant 0 : i32
    return %arg0, %arg1, %c0_i32, %c0_i32_0 : i32, i32, i32, i32
  }
}

</mosaic_0001>

<llo_original>
// kernel: tpu_custom_call.1
$region0: #{tpu_custom_call.1}
  #allocation0 [shape = 'u32[]', space=smem, size = 0x4, offset = 0x4, fixed_abs, tag = 'smem constant byte address 0x4 - core index']
  #allocation1 [shape = 'u32[144,128]{1,0:T(1,128)}', space=vmem, size = 0x12000, scoped, tag = 'internal scratch']
  #allocation2 [shape = 'f32[256,128]{1,0:T(8,128)}', space=vmem, size = 0x20000, scoped, tag = 'scratch operand']
  %s0 = inlined_call_operand.vmem [shape: f32[2,1,18,16,12], index: 0, kind: input, shape index: {}]
  %s1 = inlined_call_operand.vmem [shape: f32[3,12,128], index: 1, kind: input, shape index: {}]
  %s2 = inlined_call_operand.vmem [shape: f32[1,128], index: 2, kind: input, shape index: {}]
  %s3 = inlined_call_operand.hbm [shape: f32[2,16,16,128], index: 3, kind: output, shape index: {}]
  %s4 = sld [smem:[#allocation0]]
  $region45: #{tpu_custom_call.1} parent=0
    _
  %s6 = ssub.s32 1, %s4
  %s7 = scalar_select 0, %s6, %s4
  $region1: #{tpu_custom_call.1} parent=0
    #allocation3 [shape = 'u8[262144]{0}', space=vmem, size = 0x40000, scoped, tag = 'output window, operand 0']
    #allocation4 [shape = 's32[2]{0}', space=sflag, size = 0x8, scoped, tag = 'scoped memory for tpu_custom_call.1']
    %8 = vsyncpa [#allocation4], 0
    %s9 = scalar_lea.sflag [#allocation4], 1
    %10 = vsyncpa %s9, 0
    loop: start=0, step=1, limit=4
    $region2: #{tpu_custom_call.1} parent=1 // loop_pre_header
      _
    $region3: #{tpu_custom_call.1} parent=1 // loop_header
      %s12 = sphi 0, %s16
      %p13 = scmp.ge.s32.totalorder %s12, 4
      %s19 = sphi 0, %s31
      %s20 = sphi 0, %s27
      %s21 = sphi 0, %s19
      %s22 = sphi 0, %s20
      %s23 = sphi 0, %s21
      %s24 = sphi 0, %s22
      %s36 = sphi 0, %s38
      %s39 = sphi 0, %s36
      %s40 = sphi 0, %s39
      %s56 = sphi 0, %s40
      %s60 = sphi 0, %s60
      %s62 = sphi 0, %s60
      %s63 = sphi 0, %s62
      %s77 = sphi 0, %s63
      %s81 = sphi 0, %s81
      %s83 = sphi 0, %s81
      %s84 = sphi 0, %s83
      %s98 = sphi 0, %s84
      %s106 = sphi 0, %s108
      %s109 = sphi 0, %s106
      %s110 = sphi 0, %s109
      %s126 = sphi 0, %s110
    $region4: #{tpu_custom_call.1} parent=1 // loop_header_branch
      %15 = sbr.rel (%p13) target = $region8
    $region5: #{tpu_custom_call.1} parent=1 // loop_body
      %s17 = ssub.s32 %s12, 1
      %s18 = ssub.s32 %s12, 2
      %s25 = sadd.s32 1, %s20
      %p26 = scmp.ge.s32.totalorder %s25, 1
      %s27 = scalar_select %p26, 0, %s25
      %s28 = sadd.s32 1, %s19
      %s29 = scalar_select %p26, %s28, %s19
      %p30 = scmp.ge.s32.totalorder %s29, 2
      %s31 = scalar_select %p30, 0, %s29
      %s32 = ssub.s32 %s19, %s31
      %s33 = ssub.s32 %s20, %s27
      %s34 = sor.u32 %s32, %s33
      %p35 = scmp.eq.s32.totalorder %s34, 0
      %s37 = sadd.s32 %s36, 1
      %s38 = scalar_select %p35, %s36, %s37
      %p41 = pneg %p35
      %p42 = scmp.eq.s32.totalorder %s12, 1
      %p43 = por %p41, %p42
      %p44 = scmp.ne.s32.totalorder %s36, %s39
      %p45 = scmp.eq.s32.totalorder %s12, 0
      %p46 = por %p44, %p45
      %p47 = scmp.ne.s32.totalorder %s36, %s39
      %p48 = scmp.eq.s32.totalorder %s17, 1
      %p49 = por %p47, %p48
      %p50 = scmp.ne.s32.totalorder %s39, %s40
      %p51 = scmp.eq.s32.totalorder %s17, 0
      %p52 = por %p50, %p51
      %p53 = scmp.ne.s32.totalorder %s39, %s40
      %p54 = scmp.eq.s32.totalorder %s18, 1
      %p55 = por %p53, %p54
      %p57 = scmp.ne.s32.totalorder %s40, %s56
      %p58 = scmp.eq.s32.totalorder %s18, 0
      %p59 = por %p57, %p58
      %s61 = sadd.s32 %s60, 1
      %p64 = scmp.eq.s32.totalorder %s12, 1
      %p65 = scmp.ne.s32.totalorder %s60, %s62
      %p66 = scmp.eq.s32.totalorder %s12, 0
      %p67 = por %p65, %p66
      %p68 = scmp.ne.s32.totalorder %s60, %s62
      %p69 = scmp.eq.s32.totalorder %s17, 1
      %p70 = por %p68, %p69
      %p71 = scmp.ne.s32.totalorder %s62, %s63
      %p72 = scmp.eq.s32.totalorder %s17, 0
      %p73 = por %p71, %p72
      %p74 = scmp.ne.s32.totalorder %s62, %s63
      %p75 = scmp.eq.s32.totalorder %s18, 1
      %p76 = por %p74, %p75
      %p78 = scmp.ne.s32.totalorder %s63, %s77
      %p79 = scmp.eq.s32.totalorder %s18, 0
      %p80 = por %p78, %p79
      %s82 = sadd.s32 %s81, 1
      %p85 = scmp.eq.s32.totalorder %s12, 1
      %p86 = scmp.ne.s32.totalorder %s81, %s83
      %p87 = scmp.eq.s32.totalorder %s12, 0
      %p88 = por %p86, %p87
      %p89 = scmp.ne.s32.totalorder %s81, %s83
      %p90 = scmp.eq.s32.totalorder %s17, 1
      %p91 = por %p89, %p90
      %p92 = scmp.ne.s32.totalorder %s83, %s84
      %p93 = scmp.eq.s32.totalorder %s17, 0
      %p94 = por %p92, %p93
      %p95 = scmp.ne.s32.totalorder %s83, %s84
      %p96 = scmp.eq.s32.totalorder %s18, 1
      %p97 = por %p95, %p96
      %p99 = scmp.ne.s32.totalorder %s84, %s98
      %p100 = scmp.eq.s32.totalorder %s18, 0
      %p101 = por %p99, %p100
      %s102 = ssub.s32 %s19, %s31
      %s103 = ssub.s32 %s20, %s27
      %s104 = sor.u32 %s102, %s103
      %p105 = scmp.eq.s32.totalorder %s104, 0
      %s107 = sadd.s32 %s106, 1
      %s108 = scalar_select %p105, %s106, %s107
      %p111 = pneg %p105
      %p112 = scmp.eq.s32.totalorder %s12, 1
      %p113 = por %p111, %p112
      %p114 = scmp.ne.s32.totalorder %s106, %s109
      %p115 = scmp.eq.s32.totalorder %s12, 0
      %p116 = por %p114, %p115
      %p117 = scmp.ne.s32.totalorder %s106, %s109
      %p118 = scmp.eq.s32.totalorder %s17, 1
      %p119 = por %p117, %p118
      %p120 = scmp.ne.s32.totalorder %s109, %s110
      %p121 = scmp.eq.s32.totalorder %s17, 0
      %p122 = por %p120, %p121
      %p123 = scmp.ne.s32.totalorder %s109, %s110
      %p124 = scmp.eq.s32.totalorder %s18, 1
      %p125 = por %p123, %p124
      %p127 = scmp.ne.s32.totalorder %s110, %s126
      %p128 = scmp.eq.s32.totalorder %s18, 0
      %p129 = por %p127, %p128
      %p130 = scmp.le.s32.totalorder 1, %s12
      %p131 = scmp.lt.s32.totalorder %s12, 3
      %p132 = pnand %p130, %p131
      %p133 = pneg %p132
      // Predicated region
      $region9: #{tpu_custom_call.1} parent=5 // pred_check
        _
      $region10: #{tpu_custom_call.1} parent=5 // pred_check_branch
        %135 = sbr.rel (%p132) target = $region12
      $region11: #{tpu_custom_call.1} parent=5 // pred_region
        %s136 = ssub.s32 %s12, 1
        // Predicated region
        $region13: #{tpu_custom_call.1} parent=11 // pred_check
          %p137 = pneg %p73
        $region14: #{tpu_custom_call.1} parent=11 // pred_check_branch
          %139 = sbr.rel (%p137) target = $region16
        $region15: #{tpu_custom_call.1} parent=11 // pred_region
          _
        $region16: #{tpu_custom_call.1} parent=11 // pred_fallthru
          _
        // Predicated region
        $region17: #{tpu_custom_call.1} parent=11 // pred_check
          %p140 = pneg %p94
        $region18: #{tpu_custom_call.1} parent=11 // pred_check_branch
          %142 = sbr.rel (%p140) target = $region20
        $region19: #{tpu_custom_call.1} parent=11 // pred_region
          _
        $region20: #{tpu_custom_call.1} parent=11 // pred_fallthru
          _
      $region12: #{tpu_custom_call.1} parent=5 // pred_fallthru
        _
      %p143 = scmp.lt.s32.totalorder %s12, 2
      // Predicated region
      $region21: #{tpu_custom_call.1} parent=5 // pred_check
        %p144 = pneg %p143
      $region22: #{tpu_custom_call.1} parent=5 // pred_check_branch
        %146 = sbr.rel (%p144) target = $region24
      $region23: #{tpu_custom_call.1} parent=5 // pred_region
        // Predicated region
        $region25: #{tpu_custom_call.1} parent=23 // pred_check
          %p147 = pneg %p46
        $region26: #{tpu_custom_call.1} parent=23 // pred_check_branch
          %149 = sbr.rel (%p147) target = $region28
        $region27: #{tpu_custom_call.1} parent=23 // pred_region
          %p150 = scmp.lt.s32.totalorder %s19, 1
          %s151 = scalar_select %p150, %s19, 1
          %p152 = scmp.lt.s32.totalorder %s20, 0
          %s153 = scalar_select %p152, %s20, 0
          %s154 = smul.addr %s153, 36
          %s155 = smul.addr %s151, 36
          %s156 = sadd.s32 %s154, %s155
          %s157 = smul.addr %s156, 8
          %s158 = scalar_lea.vmem %s0, %s157
        $region28: #{tpu_custom_call.1} parent=23 // pred_fallthru
          _
      $region24: #{tpu_custom_call.1} parent=5 // pred_fallthru
        _
      %p159 = scmp.le.s32.totalorder 1, %s12
      %p160 = scmp.lt.s32.totalorder %s12, 3
      %p161 = pnand %p159, %p160
      %p162 = pneg %p161
      // Predicated region
      $region29: #{tpu_custom_call.1} parent=5 // pred_check
        _
      $region30: #{tpu_custom_call.1} parent=5 // pred_check_branch
        %164 = sbr.rel (%p161) target = $region32
      $region31: #{tpu_custom_call.1} parent=5 // pred_region
        %s165 = ssub.s32 %s12, 1
        %p166 = scmp.lt.s32.totalorder %s21, 1
        %s167 = scalar_select %p166, %s21, 1
        %p168 = scmp.lt.s32.totalorder %s22, 0
        %s169 = scalar_select %p168, %s22, 0
        %s170 = smul.addr %s169, 36
        %s171 = smul.addr %s167, 36
        %s172 = sadd.s32 %s170, %s171
        %s173 = smul.addr %s172, 8
        %s174 = scalar_lea.vmem %s0, %s173
        %p175 = pneg %p52
        %p176 = pneg %p49
        %p177 = pneg %p73
        %p178 = pneg %p70
        %p179 = pneg %p94
        %p180 = pneg %p91
        %p181 = pneg %p122
        %p182 = pneg %p119
        %s183 = sand.u32 %s109, 1
        %s184 = scalar_lea.sflag [#allocation4], %s183
        %s185 = sand.u32 %s109, 1
        %s186 = smul.addr %s185, 256
        %s187 = scalar_lea.vmem [#allocation3], %s186
        %p188 = scmp.lt.s32.totalorder %s21, 1
        %s189 = scalar_select %p188, %s21, 1
        %p190 = scmp.lt.s32.totalorder %s22, 0
        %s191 = scalar_select %p190, %s22, 0
        %s192 = smul.addr %s191, 36
        %s193 = smul.addr %s189, 36
        %s194 = sadd.s32 %s192, %s193
        %s195 = smul.addr %s194, 8
        %s196 = scalar_lea.vmem %s0, %s195
        %s197 = smul.u32 16, %s22
        %v198 = vld [vmem:[%s196] sm:$0xff]
        %v199 = vld [vmem:[%s196 + $0x8] sm:$0xff]
        %v200 = vld [vmem:[%s196 + $0x10] sm:$0xff]
        %v201 = vld [vmem:[%s196 + $0x18] sm:$0xff]
        %v202 = vld [vmem:[%s196 + $0x20] sm:$0xff]
        %v203 = vld [vmem:[%s196 + $0x28] sm:$0xff]
        %v204 = vld [vmem:[%s196 + $0x30] sm:$0xff]
        %v205 = vld [vmem:[%s196 + $0x38] sm:$0xff]
        %v206 = vld [vmem:[%s196 + $0x40] sm:$0xff]
        %v207 = vld [vmem:[%s196 + $0x48] sm:$0xff]
        %v208 = vld [vmem:[%s196 + $0x50] sm:$0xff]
        %v209 = vld [vmem:[%s196 + $0x58] sm:$0xff]
        %v210 = vld [vmem:[%s196 + $0x60] sm:$0xff]
        %v211 = vld [vmem:[%s196 + $0x68] sm:$0xff]
        %v212 = vld [vmem:[%s196 + $0x70] sm:$0xff]
        %v213 = vld [vmem:[%s196 + $0x78] sm:$0xff]
        %v214 = vld [vmem:[%s196 + $0x80] sm:$0xff]
        %v215 = vld [vmem:[%s196 + $0x88] sm:$0xff]
        %v216 = vld [vmem:[%s196 + $0x90] sm:$0xff]
        %v217 = vld [vmem:[%s196 + $0x98] sm:$0xff]
        %v218 = vld [vmem:[%s196 + $0xa0] sm:$0xff]
        %v219 = vld [vmem:[%s196 + $0xa8] sm:$0xff]
        %v220 = vld [vmem:[%s196 + $0xb0] sm:$0xff]
        %v221 = vld [vmem:[%s196 + $0xb8] sm:$0xff]
        %v222 = vld [vmem:[%s196 + $0xc0] sm:$0xff]
        %v223 = vld [vmem:[%s196 + $0xc8] sm:$0xff]
        %v224 = vld [vmem:[%s196 + $0xd0] sm:$0xff]
        %v225 = vld [vmem:[%s196 + $0xd8] sm:$0xff]
        %v226 = vld [vmem:[%s196 + $0xe0] sm:$0xff]
        %v227 = vld [vmem:[%s196 + $0xe8] sm:$0xff]
        %v228 = vld [vmem:[%s196 + $0xf0] sm:$0xff]
        %v229 = vld [vmem:[%s196 + $0xf8] sm:$0xff]
        %v230 = vld [vmem:[%s1] sm:$0xff]
        %v231 = vld [vmem:[%s1 + $0x8] sm:$0xf]
        %vm232 = vcmask 97280
        %v234 = vsel %vm232, %v198, 0
        %v237 = vsel %vm232, %v199, 0
        %v240 = vsel %vm232, %v200, 0
        %v243 = vsel %vm232, %v201, 0
        %v246 = vsel %vm232, %v202, 0
        %v249 = vsel %vm232, %v203, 0
        %v252 = vsel %vm232, %v204, 0
        %v255 = vsel %vm232, %v205, 0
        %v258 = vsel %vm232, %v206, 0
        %v261 = vsel %vm232, %v207, 0
        %v264 = vsel %vm232, %v208, 0
        %v267 = vsel %vm232, %v209, 0
        %v270 = vsel %vm232, %v210, 0
        %v273 = vsel %vm232, %v211, 0
        %v276 = vsel %vm232, %v212, 0
        %v279 = vsel %vm232, %v213, 0
        %v282 = vsel %vm232, %v214, 0
        %v285 = vsel %vm232, %v215, 0
        %v288 = vsel %vm232, %v216, 0
        %v291 = vsel %vm232, %v217, 0
        %v294 = vsel %vm232, %v218, 0
        %v297 = vsel %vm232, %v219, 0
        %v300 = vsel %vm232, %v220, 0
        %v303 = vsel %vm232, %v221, 0
        %v306 = vsel %vm232, %v222, 0
        %v309 = vsel %vm232, %v223, 0
        %v312 = vsel %vm232, %v224, 0
        %v315 = vsel %vm232, %v225, 0
        %v318 = vsel %vm232, %v226, 0
        %v321 = vsel %vm232, %v227, 0
        %v324 = vsel %vm232, %v228, 0
        %v327 = vsel %vm232, %v229, 0
        %vm329 = vcmask 1043456
        %v331 = vsel %vm329, %v231, 0
        %333 = vmatprep.subr.mxu0 0.0
        %334 = vmatpush1.msra.mxu0 %v230
        %335 = vmatprep.subr.mxu0 0.0
        %336 = vmatpush1.msra.mxu0 %v331
        %337 = vmatprep.subr.mxu0 0.0
        %338 = vmatpush1.msra.mxu0 0.0
        %339 = vmatprep.subr.mxu0 0.0
        %340 = vmatpush1.msra.mxu0 0.0
        %341 = vmatprep.subr.mxu0 0.0
        %342 = vmatpush1.msra.mxu0 0.0
        %343 = vmatprep.subr.mxu0 0.0
        %344 = vmatpush1.msra.mxu0 0.0
        %345 = vmatprep.subr.mxu0 0.0
        %346 = vmatpush1.msra.mxu0 0.0
        %347 = vmatprep.subr.mxu0 0.0
        %348 = vmatpush1.msra.mxu0 0.0
        %349 = vmatprep.subr.mxu0 0.0
        %350 = vmatpush1.msra.mxu0 0.0
        %351 = vmatprep.subr.mxu0 0.0
        %352 = vmatpush1.msra.mxu0 0.0
        %353 = vmatprep.subr.mxu0 0.0
        %354 = vmatpush1.msra.mxu0 0.0
        %355 = vmatprep.subr.mxu0 0.0
        %356 = vmatpush1.msra.mxu0 0.0
        %357 = vmatprep.subr.mxu0 0.0
        %358 = vmatpush1.msra.mxu0 0.0
        %359 = vmatprep.subr.mxu0 0.0
        %360 = vmatpush1.msra.mxu0 0.0
        %361 = vmatprep.subr.mxu0 0.0
        %362 = vmatpush1.msra.mxu0 0.0
        %363 = vmatprep.subr.mxu0 0.0
        %364 = vmatpush1.msra.mxu0 0.0
        %365 = vmatprep.subr.mxu0 0.0
        %366 = vmatpush1.msra.mxu0 0.0
        %367 = vmatprep.subr.mxu0 0.0
        %368 = vmatpush1.msra.mxu0 0.0
        %369 = vmatprep.subr.mxu0 0.0
        %370 = vmatpush1.msra.mxu0 0.0
        %371 = vmatprep.subr.mxu0 0.0
        %372 = vmatpush1.msra.mxu0 0.0
        %373 = vmatprep.subr.mxu0 0.0
        %374 = vmatpush1.msra.mxu0 0.0
        %375 = vmatprep.subr.mxu0 0.0
        %376 = vmatpush1.msra.mxu0 0.0
        %377 = vmatprep.subr.mxu0 0.0
        %378 = vmatpush1.msra.mxu0 0.0
        %379 = vmatprep.subr.mxu0 0.0
        %380 = vmatpush1.msra.mxu0 0.0
        %381 = vmatprep.subr.mxu0 0.0
        %382 = vmatpush1.msra.mxu0 0.0
        %383 = vmatprep.subr.mxu0 0.0
        %384 = vmatpush1.msra.mxu0 0.0
        %385 = vmatprep.subr.mxu0 0.0
        %386 = vmatpush1.msra.mxu0 0.0
        %387 = vmatprep.subr.mxu0 0.0
        %388 = vmatpush1.msra.mxu0 0.0
        %389 = vmatprep.subr.mxu0 0.0
        %390 = vmatpush1.msra.mxu0 0.0
        %391 = vmatprep.subr.mxu0 0.0
        %392 = vmatpush1.msra.mxu0 0.0
        %393 = vmatprep.subr.mxu0 0.0
        %394 = vmatpush1.msra.mxu0 0.0
        %395 = vmatprep.subr.mxu0 0.0
        %396 = vmatpush1.msra.mxu0 0.0
        %397 = vmatprep.mubr.f32.mxu0 0.0
        %398 = vmatmul.mubr.f32.gmra.mrb[0].mxu0 %v234
        %v399 = vpop.f32.mrb[0].mxu0
        %v400 = vadd.f32 0.0, %v399
        %v401 = vpop.f32.mrb[0].mxu0
        %402 = vmatprep.mubr.f32.mxu0 0.0
        %403 = vmatmul.mubr.f32.gmra.mrb[0].mxu0 %v237
        %v404 = vpop.f32.mrb[0].mxu0
        %v405 = vadd.f32 0.0, %v404
        %v406 = vpop.f32.mrb[0].mxu0
        %407 = vmatprep.mubr.f32.mxu0 0.0
        %408 = vmatmul.mubr.f32.gmra.mrb[0].mxu0 %v240
        %v409 = vpop.f32.mrb[0].mxu0
        %v410 = vadd.f32 0.0, %v409
        %v411 = vpop.f32.mrb[0].mxu0
        %412 = vmatprep.mubr.f32.mxu0 0.0
        %413 = vmatmul.mubr.f32.gmra.mrb[0].mxu0 %v243
        %v414 = vpop.f32.mrb[0].mxu0
        %v415 = vadd.f32 0.0, %v414
        %v416 = vpop.f32.mrb[0].mxu0
        %417 = vmatprep.mubr.f32.mxu0 0.0
        %418 = vmatmul.mubr.f32.gmra.mrb[0].mxu0 %v246
        %v419 = vpop.f32.mrb[0].mxu0
        %v420 = vadd.f32 0.0, %v419
        %v421 = vpop.f32.mrb[0].mxu0
        %422 = vmatprep.mubr.f32.mxu0 0.0
        %423 = vmatmul.mubr.f32.gmra.mrb[0].mxu0 %v249
        %v424 = vpop.f32.mrb[0].mxu0
        %v425 = vadd.f32 0.0, %v424
        %v426 = vpop.f32.mrb[0].mxu0
        %427 = vmatprep.mubr.f32.mxu0 0.0
        %428 = vmatmul.mubr.f32.gmra.mrb[0].mxu0 %v252
        %v429 = vpop.f32.mrb[0].mxu0
        %v430 = vadd.f32 0.0, %v429
        %v431 = vpop.f32.mrb[0].mxu0
        %432 = vmatprep.mubr.f32.mxu0 0.0
        %433 = vmatmul.mubr.f32.gmra.mrb[0].mxu0 %v255
        %v434 = vpop.f32.mrb[0].mxu0
        %v435 = vadd.f32 0.0, %v434
        %v436 = vpop.f32.mrb[0].mxu0
        %437 = vmatprep.mubr.f32.mxu0 0.0
        %438 = vmatmul.mubr.f32.gmra.mrb[0].mxu0 %v258
        %v439 = vpop.f32.mrb[0].mxu0
        %v440 = vadd.f32 0.0, %v439
        %v441 = vpop.f32.mrb[0].mxu0
        %442 = vmatprep.mubr.f32.mxu0 0.0
        %443 = vmatmul.mubr.f32.gmra.mrb[0].mxu0 %v261
        %v444 = vpop.f32.mrb[0].mxu0
        %v445 = vadd.f32 0.0, %v444
        %v446 = vpop.f32.mrb[0].mxu0
        %447 = vmatprep.mubr.f32.mxu0 0.0
        %448 = vmatmul.mubr.f32.gmra.mrb[0].mxu0 %v264
        %v449 = vpop.f32.mrb[0].mxu0
        %v450 = vadd.f32 0.0, %v449
        %v451 = vpop.f32.mrb[0].mxu0
        %452 = vmatprep.mubr.f32.mxu0 0.0
        %453 = vmatmul.mubr.f32.gmra.mrb[0].mxu0 %v267
        %v454 = vpop.f32.mrb[0].mxu0
        %v455 = vadd.f32 0.0, %v454
        %v456 = vpop.f32.mrb[0].mxu0
        %457 = vmatprep.mubr.f32.mxu0 0.0
        %458 = vmatmul.mubr.f32.gmra.mrb[0].mxu0 %v270
        %v459 = vpop.f32.mrb[0].mxu0
        %v460 = vadd.f32 0.0, %v459
        %v461 = vpop.f32.mrb[0].mxu0
        %462 = vmatprep.mubr.f32.mxu0 0.0
        %463 = vmatmul.mubr.f32.gmra.mrb[0].mxu0 %v273
        %v464 = vpop.f32.mrb[0].mxu0
        %v465 = vadd.f32 0.0, %v464
        %v466 = vpop.f32.mrb[0].mxu0
        %467 = vmatprep.mubr.f32.mxu0 0.0
        %468 = vmatmul.mubr.f32.gmra.mrb[0].mxu0 %v276
        %v469 = vpop.f32.mrb[0].mxu0
        %v470 = vadd.f32 0.0, %v469
        %v471 = vpop.f32.mrb[0].mxu0
        %472 = vmatprep.mubr.f32.mxu0 0.0
        %473 = vmatmul.mubr.f32.gmra.mrb[0].mxu0 %v279
        %v474 = vpop.f32.mrb[0].mxu0
        %v475 = vadd.f32 0.0, %v474
        %v476 = vpop.f32.mrb[0].mxu0
        %477 = vmatprep.mubr.f32.mxu0 0.0
        %478 = vmatmul.mubr.f32.gmra.mrb[0].mxu0 %v282
        %v479 = vpop.f32.mrb[0].mxu0
        %v480 = vadd.f32 0.0, %v479
        %v481 = vpop.f32.mrb[0].mxu0
        %482 = vmatprep.mubr.f32.mxu0 0.0
        %483 = vmatmul.mubr.f32.gmra.mrb[0].mxu0 %v285
        %v484 = vpop.f32.mrb[0].mxu0
        %v485 = vadd.f32 0.0, %v484
        %v486 = vpop.f32.mrb[0].mxu0
        %487 = vmatprep.mubr.f32.mxu0 0.0
        %488 = vmatmul.mubr.f32.gmra.mrb[0].mxu0 %v288
        %v489 = vpop.f32.mrb[0].mxu0
        %v490 = vadd.f32 0.0, %v489
        %v491 = vpop.f32.mrb[0].mxu0
        %492 = vmatprep.mubr.f32.mxu0 0.0
        %493 = vmatmul.mubr.f32.gmra.mrb[0].mxu0 %v291
        %v494 = vpop.f32.mrb[0].mxu0
        %v495 = vadd.f32 0.0, %v494
        %v496 = vpop.f32.mrb[0].mxu0
        %497 = vmatprep.mubr.f32.mxu0 0.0
        %498 = vmatmul.mubr.f32.gmra.mrb[0].mxu0 %v294
        %v499 = vpop.f32.mrb[0].mxu0
        %v500 = vadd.f32 0.0, %v499
        %v501 = vpop.f32.mrb[0].mxu0
        %502 = vmatprep.mubr.f32.mxu0 0.0
        %503 = vmatmul.mubr.f32.gmra.mrb[0].mxu0 %v297
        %v504 = vpop.f32.mrb[0].mxu0
        %v505 = vadd.f32 0.0, %v504
        %v506 = vpop.f32.mrb[0].mxu0
        %507 = vmatprep.mubr.f32.mxu0 0.0
        %508 = vmatmul.mubr.f32.gmra.mrb[0].mxu0 %v300
        %v509 = vpop.f32.mrb[0].mxu0
        %v510 = vadd.f32 0.0, %v509
        %v511 = vpop.f32.mrb[0].mxu0
        %512 = vmatprep.mubr.f32.mxu0 0.0
        %513 = vmatmul.mubr.f32.gmra.mrb[0].mxu0 %v303
        %v514 = vpop.f32.mrb[0].mxu0
        %v515 = vadd.f32 0.0, %v514
        %v516 = vpop.f32.mrb[0].mxu0
        %517 = vmatprep.mubr.f32.mxu0 0.0
        %518 = vmatmul.mubr.f32.gmra.mrb[0].mxu0 %v306
        %v519 = vpop.f32.mrb[0].mxu0
        %v520 = vadd.f32 0.0, %v519
        %v521 = vpop.f32.mrb[0].mxu0
        %522 = vmatprep.mubr.f32.mxu0 0.0
        %523 = vmatmul.mubr.f32.gmra.mrb[0].mxu0 %v309
        %v524 = vpop.f32.mrb[0].mxu0
        %v525 = vadd.f32 0.0, %v524
        %v526 = vpop.f32.mrb[0].mxu0
        %527 = vmatprep.mubr.f32.mxu0 0.0
        %528 = vmatmul.mubr.f32.gmra.mrb[0].mxu0 %v312
        %v529 = vpop.f32.mrb[0].mxu0
        %v530 = vadd.f32 0.0, %v529
        %v531 = vpop.f32.mrb[0].mxu0
        %532 = vmatprep.mubr.f32.mxu0 0.0
        %533 = vmatmul.mubr.f32.gmra.mrb[0].mxu0 %v315
        %v534 = vpop.f32.mrb[0].mxu0
        %v535 = vadd.f32 0.0, %v534
        %v536 = vpop.f32.mrb[0].mxu0
        %537 = vmatprep.mubr.f32.mxu0 0.0
        %538 = vmatmul.mubr.f32.gmra.mrb[0].mxu0 %v318
        %v539 = vpop.f32.mrb[0].mxu0
        %v540 = vadd.f32 0.0, %v539
        %v541 = vpop.f32.mrb[0].mxu0
        %542 = vmatprep.mubr.f32.mxu0 0.0
        %543 = vmatmul.mubr.f32.gmra.mrb[0].mxu0 %v321
        %v544 = vpop.f32.mrb[0].mxu0
        %v545 = vadd.f32 0.0, %v544
        %v546 = vpop.f32.mrb[0].mxu0
        %547 = vmatprep.mubr.f32.mxu0 0.0
        %548 = vmatmul.mubr.f32.gmra.mrb[0].mxu0 %v324
        %v549 = vpop.f32.mrb[0].mxu0
        %v550 = vadd.f32 0.0, %v549
        %v551 = vpop.f32.mrb[0].mxu0
        %552 = vmatprep.mubr.f32.mxu0 0.0
        %553 = vmatmul.mubr.f32.gmra.mrb[0].mxu0 %v327
        %v554 = vpop.f32.mrb[0].mxu0
        %v555 = vadd.f32 0.0, %v554
        %v556 = vpop.f32.mrb[0].mxu0
        %557 = vdwg.mxu0
        %558 = vst [vmem:[#allocation2] sm:$0xff] %v400
        %559 = vst [vmem:[#allocation2 + $0x8] sm:$0xff] %v405
        %560 = vst [vmem:[#allocation2 + $0x10] sm:$0xff] %v410
        %561 = vst [vmem:[#allocation2 + $0x18] sm:$0xff] %v415
        %562 = vst [vmem:[#allocation2 + $0x20] sm:$0xff] %v420
        %563 = vst [vmem:[#allocation2 + $0x28] sm:$0xff] %v425
        %564 = vst [vmem:[#allocation2 + $0x30] sm:$0xff] %v430
        %565 = vst [vmem:[#allocation2 + $0x38] sm:$0xff] %v435
        %566 = vst [vmem:[#allocation2 + $0x40] sm:$0xff] %v440
        %567 = vst [vmem:[#allocation2 + $0x48] sm:$0xff] %v445
        %568 = vst [vmem:[#allocation2 + $0x50] sm:$0xff] %v450
        %569 = vst [vmem:[#allocation2 + $0x58] sm:$0xff] %v455
        %570 = vst [vmem:[#allocation2 + $0x60] sm:$0xff] %v460
        %571 = vst [vmem:[#allocation2 + $0x68] sm:$0xff] %v465
        %572 = vst [vmem:[#allocation2 + $0x70] sm:$0xff] %v470
        %573 = vst [vmem:[#allocation2 + $0x78] sm:$0xff] %v475
        %574 = vst [vmem:[#allocation2 + $0x80] sm:$0xff] %v480
        %575 = vst [vmem:[#allocation2 + $0x88] sm:$0xff] %v485
        %576 = vst [vmem:[#allocation2 + $0x90] sm:$0xff] %v490
        %577 = vst [vmem:[#allocation2 + $0x98] sm:$0xff] %v495
        %578 = vst [vmem:[#allocation2 + $0xa0] sm:$0xff] %v500
        %579 = vst [vmem:[#allocation2 + $0xa8] sm:$0xff] %v505
        %580 = vst [vmem:[#allocation2 + $0xb0] sm:$0xff] %v510
        %581 = vst [vmem:[#allocation2 + $0xb8] sm:$0xff] %v515
        %582 = vst [vmem:[#allocation2 + $0xc0] sm:$0xff] %v520
        %583 = vst [vmem:[#allocation2 + $0xc8] sm:$0xff] %v525
        %584 = vst [vmem:[#allocation2 + $0xd0] sm:$0xff] %v530
        %585 = vst [vmem:[#allocation2 + $0xd8] sm:$0xff] %v535
        %586 = vst [vmem:[#allocation2 + $0xe0] sm:$0xff] %v540
        %587 = vst [vmem:[#allocation2 + $0xe8] sm:$0xff] %v545
        %588 = vst [vmem:[#allocation2 + $0xf0] sm:$0xff] %v550
        %589 = vst [vmem:[#allocation2 + $0xf8] sm:$0xff] %v555
        %s590 = scalar_lea.vmem %s196, 16
        %v591 = vld [vmem:[%s590] sm:$0xff]
        %v592 = vld [vmem:[%s590 + $0x8] sm:$0xff]
        %v593 = vld [vmem:[%s590 + $0x10] sm:$0xff]
        %v594 = vld [vmem:[%s590 + $0x18] sm:$0xff]
        %v595 = vld [vmem:[%s590 + $0x20] sm:$0xff]
        %v596 = vld [vmem:[%s590 + $0x28] sm:$0xff]
        %v597 = vld [vmem:[%s590 + $0x30] sm:$0xff]
        %v598 = vld [vmem:[%s590 + $0x38] sm:$0xff]
        %v599 = vld [vmem:[%s590 + $0x40] sm:$0xff]
        %v600 = vld [vmem:[%s590 + $0x48] sm:$0xff]
        %v601 = vld [vmem:[%s590 + $0x50] sm:$0xff]
        %v602 = vld [vmem:[%s590 + $0x58] sm:$0xff]
        %v603 = vld [vmem:[%s590 + $0x60] sm:$0xff]
        %v604 = vld [vmem:[%s590 + $0x68] sm:$0xff]
        %v605 = vld [vmem:[%s590 + $0x70] sm:$0xff]
        %v606 = vld [vmem:[%s590 + $0x78] sm:$0xff]
        %v607 = vld [vmem:[%s590 + $0x80] sm:$0xff]
        %v608 = vld [vmem:[%s590 + $0x88] sm:$0xff]
        %v609 = vld [vmem:[%s590 + $0x90] sm:$0xff]
        %v610 = vld [vmem:[%s590 + $0x98] sm:$0xff]
        %v611 = vld [vmem:[%s590 + $0xa0] sm:$0xff]
        %v612 = vld [vmem:[%s590 + $0xa8] sm:$0xff]
        %v613 = vld [vmem:[%s590 + $0xb0] sm:$0xff]
        %v614 = vld [vmem:[%s590 + $0xb8] sm:$0xff]
        %v615 = vld [vmem:[%s590 + $0xc0] sm:$0xff]
        %v616 = vld [vmem:[%s590 + $0xc8] sm:$0xff]
        %v617 = vld [vmem:[%s590 + $0xd0] sm:$0xff]
        %v618 = vld [vmem:[%s590 + $0xd8] sm:$0xff]
        %v619 = vld [vmem:[%s590 + $0xe0] sm:$0xff]
        %v620 = vld [vmem:[%s590 + $0xe8] sm:$0xff]
        %v621 = vld [vmem:[%s590 + $0xf0] sm:$0xff]
        %v622 = vld [vmem:[%s590 + $0xf8] sm:$0xff]
        %s623 = scalar_lea.vmem %s1, 16
        %v624 = vld [vmem:[%s623] sm:$0xff]
        %v625 = vld [vmem:[%s623 + $0x8] sm:$0xf]
        %v627 = vsel %vm232, %v591, 0
        %v630 = vsel %vm232, %v592, 0
        %v633 = vsel %vm232, %v593, 0
        %v636 = vsel %vm232, %v594, 0
        %v639 = vsel %vm232, %v595, 0
        %v642 = vsel %vm232, %v596, 0
        %v645 = vsel %vm232, %v597, 0
        %v648 = vsel %vm232, %v598, 0
        %v651 = vsel %vm232, %v599, 0
        %v654 = vsel %vm232, %v600, 0
        %v657 = vsel %vm232, %v601, 0
        %v660 = vsel %vm232, %v602, 0
        %v663 = vsel %vm232, %v603, 0
        %v666 = vsel %vm232, %v604, 0
        %v669 = vsel %vm232, %v605, 0
        %v672 = vsel %vm232, %v606, 0
        %v675 = vsel %vm232, %v607, 0
        %v678 = vsel %vm232, %v608, 0
        %v681 = vsel %vm232, %v609, 0
        %v684 = vsel %vm232, %v610, 0
        %v687 = vsel %vm232, %v611, 0
        %v690 = vsel %vm232, %v612, 0
        %v693 = vsel %vm232, %v613, 0
        %v696 = vsel %vm232, %v614, 0
        %v699 = vsel %vm232, %v615, 0
        %v702 = vsel %vm232, %v616, 0
        %v705 = vsel %vm232, %v617, 0
        %v708 = vsel %vm232, %v618, 0
        %v711 = vsel %vm232, %v619, 0
        %v714 = vsel %vm232, %v620, 0
        %v717 = vsel %vm232, %v621, 0
        %v720 = vsel %vm232, %v622, 0
        %v723 = vsel %vm329, %v625, 0
        %725 = vmatprep.subr.mxu0 0.0
        %726 = vmatpush1.msra.mxu0 %v624
        %727 = vmatprep.subr.mxu0 0.0
        %728 = vmatpush1.msra.mxu0 %v723
        %729 = vmatprep.subr.mxu0 0.0
        %730 = vmatpush1.msra.mxu0 0.0
        %731 = vmatprep.subr.mxu0 0.0
        %732 = vmatpush1.msra.mxu0 0.0
        %733 = vmatprep.subr.mxu0 0.0
        %734 = vmatpush1.msra.mxu0 0.0
        %735 = vmatprep.subr.mxu0 0.0
        %736 = vmatpush1.msra.mxu0 0.0
        %737 = vmatprep.subr.mxu0 0.0
        %738 = vmatpush1.msra.mxu0 0.0
        %739 = vmatprep.subr.mxu0 0.0
        %740 = vmatpush1.msra.mxu0 0.0
        %741 = vmatprep.subr.mxu0 0.0
        %742 = vmatpush1.msra.mxu0 0.0
        %743 = vmatprep.subr.mxu0 0.0
        %744 = vmatpush1.msra.mxu0 0.0
        %745 = vmatprep.subr.mxu0 0.0
        %746 = vmatpush1.msra.mxu0 0.0
        %747 = vmatprep.subr.mxu0 0.0
        %748 = vmatpush1.msra.mxu0 0.0
        %749 = vmatprep.subr.mxu0 0.0
        %750 = vmatpush1.msra.mxu0 0.0
        %751 = vmatprep.subr.mxu0 0.0
        %752 = vmatpush1.msra.mxu0 0.0
        %753 = vmatprep.subr.mxu0 0.0
        %754 = vmatpush1.msra.mxu0 0.0
        %755 = vmatprep.subr.mxu0 0.0
        %756 = vmatpush1.msra.mxu0 0.0
        %757 = vmatprep.subr.mxu0 0.0
        %758 = vmatpush1.msra.mxu0 0.0
        %759 = vmatprep.subr.mxu0 0.0
        %760 = vmatpush1.msra.mxu0 0.0
        %761 = vmatprep.subr.mxu0 0.0
        %762 = vmatpush1.msra.mxu0 0.0
        %763 = vmatprep.subr.mxu0 0.0
        %764 = vmatpush1.msra.mxu0 0.0
        %765 = vmatprep.subr.mxu0 0.0
        %766 = vmatpush1.msra.mxu0 0.0
        %767 = vmatprep.subr.mxu0 0.0
        %768 = vmatpush1.msra.mxu0 0.0
        %769 = vmatprep.subr.mxu0 0.0
        %770 = vmatpush1.msra.mxu0 0.0
        %771 = vmatprep.subr.mxu0 0.0
        %772 = vmatpush1.msra.mxu0 0.0
        %773 = vmatprep.subr.mxu0 0.0
        %774 = vmatpush1.msra.mxu0 0.0
        %775 = vmatprep.subr.mxu0 0.0
        %776 = vmatpush1.msra.mxu0 0.0
        %777 = vmatprep.subr.mxu0 0.0
        %778 = vmatpush1.msra.mxu0 0.0
        %779 = vmatprep.subr.mxu0 0.0
        %780 = vmatpush1.msra.mxu0 0.0
        %781 = vmatprep.subr.mxu0 0.0
        %782 = vmatpush1.msra.mxu0 0.0
        %783 = vmatprep.subr.mxu0 0.0
        %784 = vmatpush1.msra.mxu0 0.0
        %785 = vmatprep.subr.mxu0 0.0
        %786 = vmatpush1.msra.mxu0 0.0
        %787 = vmatprep.subr.mxu0 0.0
        %788 = vmatpush1.msra.mxu0 0.0
        %789 = vmatprep.mubr.f32.mxu0 0.0
        %790 = vmatmul.mubr.f32.gmra.mrb[0].mxu0 %v627
        %v791 = vpop.f32.mrb[0].mxu0
        %v792 = vadd.f32 0.0, %v791
        %v793 = vpop.f32.mrb[0].mxu0
        %794 = vmatprep.mubr.f32.mxu0 0.0
        %795 = vmatmul.mubr.f32.gmra.mrb[0].mxu0 %v630
        %v796 = vpop.f32.mrb[0].mxu0
        %v797 = vadd.f32 0.0, %v796
        %v798 = vpop.f32.mrb[0].mxu0
        %799 = vmatprep.mubr.f32.mxu0 0.0
        %800 = vmatmul.mubr.f32.gmra.mrb[0].mxu0 %v633
        %v801 = vpop.f32.mrb[0].mxu0
        %v802 = vadd.f32 0.0, %v801
        %v803 = vpop.f32.mrb[0].mxu0
        %804 = vmatprep.mubr.f32.mxu0 0.0
        %805 = vmatmul.mubr.f32.gmra.mrb[0].mxu0 %v636
        %v806 = vpop.f32.mrb[0].mxu0
        %v807 = vadd.f32 0.0, %v806
        %v808 = vpop.f32.mrb[0].mxu0
        %809 = vmatprep.mubr.f32.mxu0 0.0
        %810 = vmatmul.mubr.f32.gmra.mrb[0].mxu0 %v639
        %v811 = vpop.f32.mrb[0].mxu0
        %v812 = vadd.f32 0.0, %v811
        %v813 = vpop.f32.mrb[0].mxu0
        %814 = vmatprep.mubr.f32.mxu0 0.0
        %815 = vmatmul.mubr.f32.gmra.mrb[0].mxu0 %v642
        %v816 = vpop.f32.mrb[0].mxu0
        %v817 = vadd.f32 0.0, %v816
        %v818 = vpop.f32.mrb[0].mxu0
        %819 = vmatprep.mubr.f32.mxu0 0.0
        %820 = vmatmul.mubr.f32.gmra.mrb[0].mxu0 %v645
        %v821 = vpop.f32.mrb[0].mxu0
        %v822 = vadd.f32 0.0, %v821
        %v823 = vpop.f32.mrb[0].mxu0
        %824 = vmatprep.mubr.f32.mxu0 0.0
        %825 = vmatmul.mubr.f32.gmra.mrb[0].mxu0 %v648
        %v826 = vpop.f32.mrb[0].mxu0
        %v827 = vadd.f32 0.0, %v826
        %v828 = vpop.f32.mrb[0].mxu0
        %829 = vmatprep.mubr.f32.mxu0 0.0
        %830 = vmatmul.mubr.f32.gmra.mrb[0].mxu0 %v651
        %v831 = vpop.f32.mrb[0].mxu0
        %v832 = vadd.f32 0.0, %v831
        %v833 = vpop.f32.mrb[0].mxu0
        %834 = vmatprep.mubr.f32.mxu0 0.0
        %835 = vmatmul.mubr.f32.gmra.mrb[0].mxu0 %v654
        %v836 = vpop.f32.mrb[0].mxu0
        %v837 = vadd.f32 0.0, %v836
        %v838 = vpop.f32.mrb[0].mxu0
        %839 = vmatprep.mubr.f32.mxu0 0.0
        %840 = vmatmul.mubr.f32.gmra.mrb[0].mxu0 %v657
        %v841 = vpop.f32.mrb[0].mxu0
        %v842 = vadd.f32 0.0, %v841
        %v843 = vpop.f32.mrb[0].mxu0
        %844 = vmatprep.mubr.f32.mxu0 0.0
        %845 = vmatmul.mubr.f32.gmra.mrb[0].mxu0 %v660
        %v846 = vpop.f32.mrb[0].mxu0
        %v847 = vadd.f32 0.0, %v846
        %v848 = vpop.f32.mrb[0].mxu0
        %849 = vmatprep.mubr.f32.mxu0 0.0
        %850 = vmatmul.mubr.f32.gmra.mrb[0].mxu0 %v663
        %v851 = vpop.f32.mrb[0].mxu0
        %v852 = vadd.f32 0.0, %v851
        %v853 = vpop.f32.mrb[0].mxu0
        %854 = vmatprep.mubr.f32.mxu0 0.0
        %855 = vmatmul.mubr.f32.gmra.mrb[0].mxu0 %v666
        %v856 = vpop.f32.mrb[0].mxu0
        %v857 = vadd.f32 0.0, %v856
        %v858 = vpop.f32.mrb[0].mxu0
        %859 = vmatprep.mubr.f32.mxu0 0.0
        %860 = vmatmul.mubr.f32.gmra.mrb[0].mxu0 %v669
        %v861 = vpop.f32.mrb[0].mxu0
        %v862 = vadd.f32 0.0, %v861
        %v863 = vpop.f32.mrb[0].mxu0
        %864 = vmatprep.mubr.f32.mxu0 0.0
        %865 = vmatmul.mubr.f32.gmra.mrb[0].mxu0 %v672
        %v866 = vpop.f32.mrb[0].mxu0
        %v867 = vadd.f32 0.0, %v866
        %v868 = vpop.f32.mrb[0].mxu0
        %869 = vmatprep.mubr.f32.mxu0 0.0
        %870 = vmatmul.mubr.f32.gmra.mrb[0].mxu0 %v675
        %v871 = vpop.f32.mrb[0].mxu0
        %v872 = vadd.f32 0.0, %v871
        %v873 = vpop.f32.mrb[0].mxu0
        %874 = vmatprep.mubr.f32.mxu0 0.0
        %875 = vmatmul.mubr.f32.gmra.mrb[0].mxu0 %v678
        %v876 = vpop.f32.mrb[0].mxu0
        %v877 = vadd.f32 0.0, %v876
        %v878 = vpop.f32.mrb[0].mxu0
        %879 = vmatprep.mubr.f32.mxu0 0.0
        %880 = vmatmul.mubr.f32.gmra.mrb[0].mxu0 %v681
        %v881 = vpop.f32.mrb[0].mxu0
        %v882 = vadd.f32 0.0, %v881
        %v883 = vpop.f32.mrb[0].mxu0
        %884 = vmatprep.mubr.f32.mxu0 0.0
        %885 = vmatmul.mubr.f32.gmra.mrb[0].mxu0 %v684
        %v886 = vpop.f32.mrb[0].mxu0
        %v887 = vadd.f32 0.0, %v886
        %v888 = vpop.f32.mrb[0].mxu0
        %889 = vmatprep.mubr.f32.mxu0 0.0
        %890 = vmatmul.mubr.f32.gmra.mrb[0].mxu0 %v687
        %v891 = vpop.f32.mrb[0].mxu0
        %v892 = vadd.f32 0.0, %v891
        %v893 = vpop.f32.mrb[0].mxu0
        %894 = vmatprep.mubr.f32.mxu0 0.0
        %895 = vmatmul.mubr.f32.gmra.mrb[0].mxu0 %v690
        %v896 = vpop.f32.mrb[0].mxu0
        %v897 = vadd.f32 0.0, %v896
        %v898 = vpop.f32.mrb[0].mxu0
        %899 = vmatprep.mubr.f32.mxu0 0.0
        %900 = vmatmul.mubr.f32.gmra.mrb[0].mxu0 %v693
        %v901 = vpop.f32.mrb[0].mxu0
        %v902 = vadd.f32 0.0, %v901
        %v903 = vpop.f32.mrb[0].mxu0
        %904 = vmatprep.mubr.f32.mxu0 0.0
        %905 = vmatmul.mubr.f32.gmra.mrb[0].mxu0 %v696
        %v906 = vpop.f32.mrb[0].mxu0
        %v907 = vadd.f32 0.0, %v906
        %v908 = vpop.f32.mrb[0].mxu0
        %909 = vmatprep.mubr.f32.mxu0 0.0
        %910 = vmatmul.mubr.f32.gmra.mrb[0].mxu0 %v699
        %v911 = vpop.f32.mrb[0].mxu0
        %v912 = vadd.f32 0.0, %v911
        %v913 = vpop.f32.mrb[0].mxu0
        %914 = vmatprep.mubr.f32.mxu0 0.0
        %915 = vmatmul.mubr.f32.gmra.mrb[0].mxu0 %v702
        %v916 = vpop.f32.mrb[0].mxu0
        %v917 = vadd.f32 0.0, %v916
        %v918 = vpop.f32.mrb[0].mxu0
        %919 = vmatprep.mubr.f32.mxu0 0.0
        %920 = vmatmul.mubr.f32.gmra.mrb[0].mxu0 %v705
        %v921 = vpop.f32.mrb[0].mxu0
        %v922 = vadd.f32 0.0, %v921
        %v923 = vpop.f32.mrb[0].mxu0
        %924 = vmatprep.mubr.f32.mxu0 0.0
        %925 = vmatmul.mubr.f32.gmra.mrb[0].mxu0 %v708
        %v926 = vpop.f32.mrb[0].mxu0
        %v927 = vadd.f32 0.0, %v926
        %v928 = vpop.f32.mrb[0].mxu0
        %929 = vmatprep.mubr.f32.mxu0 0.0
        %930 = vmatmul.mubr.f32.gmra.mrb[0].mxu0 %v711
        %v931 = vpop.f32.mrb[0].mxu0
        %v932 = vadd.f32 0.0, %v931
        %v933 = vpop.f32.mrb[0].mxu0
        %934 = vmatprep.mubr.f32.mxu0 0.0
        %935 = vmatmul.mubr.f32.gmra.mrb[0].mxu0 %v714
        %v936 = vpop.f32.mrb[0].mxu0
        %v937 = vadd.f32 0.0, %v936
        %v938 = vpop.f32.mrb[0].mxu0
        %939 = vmatprep.mubr.f32.mxu0 0.0
        %940 = vmatmul.mubr.f32.gmra.mrb[0].mxu0 %v717
        %v941 = vpop.f32.mrb[0].mxu0
        %v942 = vadd.f32 0.0, %v941
        %v943 = vpop.f32.mrb[0].mxu0
        %944 = vmatprep.mubr.f32.mxu0 0.0
        %945 = vmatmul.mubr.f32.gmra.mrb[0].mxu0 %v720
        %v946 = vpop.f32.mrb[0].mxu0
        %v947 = vadd.f32 0.0, %v946
        %v948 = vpop.f32.mrb[0].mxu0
        %949 = vdwg.mxu0
        %v950 = vld [vmem:[#allocation2] sm:$0xff]
        %v951 = vld [vmem:[#allocation2 + $0x8] sm:$0xff]
        %v952 = vld [vmem:[#allocation2 + $0x10] sm:$0xff]
        %v953 = vld [vmem:[#allocation2 + $0x18] sm:$0xff]
        %v954 = vld [vmem:[#allocation2 + $0x20] sm:$0xff]
        %v955 = vld [vmem:[#allocation2 + $0x28] sm:$0xff]
        %v956 = vld [vmem:[#allocation2 + $0x30] sm:$0xff]
        %v957 = vld [vmem:[#allocation2 + $0x38] sm:$0xff]
        %v958 = vld [vmem:[#allocation2 + $0x40] sm:$0xff]
        %v959 = vld [vmem:[#allocation2 + $0x48] sm:$0xff]
        %v960 = vld [vmem:[#allocation2 + $0x50] sm:$0xff]
        %v961 = vld [vmem:[#allocation2 + $0x58] sm:$0xff]
        %v962 = vld [vmem:[#allocation2 + $0x60] sm:$0xff]
        %v963 = vld [vmem:[#allocation2 + $0x68] sm:$0xff]
        %v964 = vld [vmem:[#allocation2 + $0x70] sm:$0xff]
        %v965 = vld [vmem:[#allocation2 + $0x78] sm:$0xff]
        %v966 = vld [vmem:[#allocation2 + $0x80] sm:$0xff]
        %v967 = vld [vmem:[#allocation2 + $0x88] sm:$0xff]
        %v968 = vld [vmem:[#allocation2 + $0x90] sm:$0xff]
        %v969 = vld [vmem:[#allocation2 + $0x98] sm:$0xff]
        %v970 = vld [vmem:[#allocation2 + $0xa0] sm:$0xff]
        %v971 = vld [vmem:[#allocation2 + $0xa8] sm:$0xff]
        %v972 = vld [vmem:[#allocation2 + $0xb0] sm:$0xff]
        %v973 = vld [vmem:[#allocation2 + $0xb8] sm:$0xff]
        %v974 = vld [vmem:[#allocation2 + $0xc0] sm:$0xff]
        %v975 = vld [vmem:[#allocation2 + $0xc8] sm:$0xff]
        %v976 = vld [vmem:[#allocation2 + $0xd0] sm:$0xff]
        %v977 = vld [vmem:[#allocation2 + $0xd8] sm:$0xff]
        %v978 = vld [vmem:[#allocation2 + $0xe0] sm:$0xff]
        %v979 = vld [vmem:[#allocation2 + $0xe8] sm:$0xff]
        %v980 = vld [vmem:[#allocation2 + $0xf0] sm:$0xff]
        %v981 = vld [vmem:[#allocation2 + $0xf8] sm:$0xff]
        %v982 = vadd.f32 %v950, %v792
        %v983 = vadd.f32 %v951, %v797
        %v984 = vadd.f32 %v952, %v802
        %v985 = vadd.f32 %v953, %v807
        %v986 = vadd.f32 %v954, %v812
        %v987 = vadd.f32 %v955, %v817
        %v988 = vadd.f32 %v956, %v822
        %v989 = vadd.f32 %v957, %v827
        %v990 = vadd.f32 %v958, %v832
        %v991 = vadd.f32 %v959, %v837
        %v992 = vadd.f32 %v960, %v842
        %v993 = vadd.f32 %v961, %v847
        %v994 = vadd.f32 %v962, %v852
        %v995 = vadd.f32 %v963, %v857
        %v996 = vadd.f32 %v964, %v862
        %v997 = vadd.f32 %v965, %v867
        %v998 = vadd.f32 %v966, %v872
        %v999 = vadd.f32 %v967, %v877
        %v1000 = vadd.f32 %v968, %v882
        %v1001 = vadd.f32 %v969, %v887
        %v1002 = vadd.f32 %v970, %v892
        %v1003 = vadd.f32 %v971, %v897
        %v1004 = vadd.f32 %v972, %v902
        %v1005 = vadd.f32 %v973, %v907
        %v1006 = vadd.f32 %v974, %v912
        %v1007 = vadd.f32 %v975, %v917
        %v1008 = vadd.f32 %v976, %v922
        %v1009 = vadd.f32 %v977, %v927
        %v1010 = vadd.f32 %v978, %v932
        %v1011 = vadd.f32 %v979, %v937
        %v1012 = vadd.f32 %v980, %v942
        %v1013 = vadd.f32 %v981, %v947
        %1014 = vst [vmem:[#allocation2] sm:$0xff] %v982
        %1015 = vst [vmem:[#allocation2 + $0x8] sm:$0xff] %v983
        %1016 = vst [vmem:[#allocation2 + $0x10] sm:$0xff] %v984
        %1017 = vst [vmem:[#allocation2 + $0x18] sm:$0xff] %v985
        %1018 = vst [vmem:[#allocation2 + $0x20] sm:$0xff] %v986
        %1019 = vst [vmem:[#allocation2 + $0x28] sm:$0xff] %v987
        %1020 = vst [vmem:[#allocation2 + $0x30] sm:$0xff] %v988
        %1021 = vst [vmem:[#allocation2 + $0x38] sm:$0xff] %v989
        %1022 = vst [vmem:[#allocation2 + $0x40] sm:$0xff] %v990
        %1023 = vst [vmem:[#allocation2 + $0x48] sm:$0xff] %v991
        %1024 = vst [vmem:[#allocation2 + $0x50] sm:$0xff] %v992
        %1025 = vst [vmem:[#allocation2 + $0x58] sm:$0xff] %v993
        %1026 = vst [vmem:[#allocation2 + $0x60] sm:$0xff] %v994
        %1027 = vst [vmem:[#allocation2 + $0x68] sm:$0xff] %v995
        %1028 = vst [vmem:[#allocation2 + $0x70] sm:$0xff] %v996
        %1029 = vst [vmem:[#allocation2 + $0x78] sm:$0xff] %v997
        %1030 = vst [vmem:[#allocation2 + $0x80] sm:$0xff] %v998
        %1031 = vst [vmem:[#allocation2 + $0x88] sm:$0xff] %v999
        %1032 = vst [vmem:[#allocation2 + $0x90] sm:$0xff] %v1000
        %1033 = vst [vmem:[#allocation2 + $0x98] sm:$0xff] %v1001
        %1034 = vst [vmem:[#allocation2 + $0xa0] sm:$0xff] %v1002
        %1035 = vst [vmem:[#allocation2 + $0xa8] sm:$0xff] %v1003
        %1036 = vst [vmem:[#allocation2 + $0xb0] sm:$0xff] %v1004
        %1037 = vst [vmem:[#allocation2 + $0xb8] sm:$0xff] %v1005
        %1038 = vst [vmem:[#allocation2 + $0xc0] sm:$0xff] %v1006
        %1039 = vst [vmem:[#allocation2 + $0xc8] sm:$0xff] %v1007
        %1040 = vst [vmem:[#allocation2 + $0xd0] sm:$0xff] %v1008
        %1041 = vst [vmem:[#allocation2 + $0xd8] sm:$0xff] %v1009
        %1042 = vst [vmem:[#allocation2 + $0xe0] sm:$0xff] %v1010
        %1043 = vst [vmem:[#allocation2 + $0xe8] sm:$0xff] %v1011
        %1044 = vst [vmem:[#allocation2 + $0xf0] sm:$0xff] %v1012
        %1045 = vst [vmem:[#allocation2 + $0xf8] sm:$0xff] %v1013
        %s1046 = scalar_lea.vmem %s196, 32
        %v1047 = vld [vmem:[%s1046] sm:$0xff]
        %v1048 = vld [vmem:[%s1046 + $0x8] sm:$0xff]
        %v1049 = vld [vmem:[%s1046 + $0x10] sm:$0xff]
        %v1050 = vld [vmem:[%s1046 + $0x18] sm:$0xff]
        %v1051 = vld [vmem:[%s1046 + $0x20] sm:$0xff]
        %v1052 = vld [vmem:[%s1046 + $0x28] sm:$0xff]
        %v1053 = vld [vmem:[%s1046 + $0x30] sm:$0xff]
        %v1054 = vld [vmem:[%s1046 + $0x38] sm:$0xff]
        %v1055 = vld [vmem:[%s1046 + $0x40] sm:$0xff]
        %v1056 = vld [vmem:[%s1046 + $0x48] sm:$0xff]
        %v1057 = vld [vmem:[%s1046 + $0x50] sm:$0xff]
        %v1058 = vld [vmem:[%s1046 + $0x58] sm:$0xff]
        %v1059 = vld [vmem:[%s1046 + $0x60] sm:$0xff]
        %v1060 = vld [vmem:[%s1046 + $0x68] sm:$0xff]
        %v1061 = vld [vmem:[%s1046 + $0x70] sm:$0xff]
        %v1062 = vld [vmem:[%s1046 + $0x78] sm:$0xff]
        %v1063 = vld [vmem:[%s1046 + $0x80] sm:$0xff]
        %v1064 = vld [vmem:[%s1046 + $0x88] sm:$0xff]
        %v1065 = vld [vmem:[%s1046 + $0x90] sm:$0xff]
        %v1066 = vld [vmem:[%s1046 + $0x98] sm:$0xff]
        %v1067 = vld [vmem:[%s1046 + $0xa0] sm:$0xff]
        %v1068 = vld [vmem:[%s1046 + $0xa8] sm:$0xff]
        %v1069 = vld [vmem:[%s1046 + $0xb0] sm:$0xff]
        %v1070 = vld [vmem:[%s1046 + $0xb8] sm:$0xff]
        %v1071 = vld [vmem:[%s1046 + $0xc0] sm:$0xff]
        %v1072 = vld [vmem:[%s1046 + $0xc8] sm:$0xff]
        %v1073 = vld [vmem:[%s1046 + $0xd0] sm:$0xff]
        %v1074 = vld [vmem:[%s1046 + $0xd8] sm:$0xff]
        %v1075 = vld [vmem:[%s1046 + $0xe0] sm:$0xff]
        %v1076 = vld [vmem:[%s1046 + $0xe8] sm:$0xff]
        %v1077 = vld [vmem:[%s1046 + $0xf0] sm:$0xff]
        %v1078 = vld [vmem:[%s1046 + $0xf8] sm:$0xff]
        %s1079 = scalar_lea.vmem %s1, 32
        %v1080 = vld [vmem:[%s1079] sm:$0xff]
        %v1081 = vld [vmem:[%s1079 + $0x8] sm:$0xf]
        %v1083 = vsel %vm232, %v1047, 0
        %v1086 = vsel %vm232, %v1048, 0
        %v1089 = vsel %vm232, %v1049, 0
        %v1092 = vsel %vm232, %v1050, 0
        %v1095 = vsel %vm232, %v1051, 0
        %v1098 = vsel %vm232, %v1052, 0
        %v1101 = vsel %vm232, %v1053, 0
        %v1104 = vsel %vm232, %v1054, 0
        %v1107 = vsel %vm232, %v1055, 0
        %v1110 = vsel %vm232, %v1056, 0
        %v1113 = vsel %vm232, %v1057, 0
        %v1116 = vsel %vm232, %v1058, 0
        %v1119 = vsel %vm232, %v1059, 0
        %v1122 = vsel %vm232, %v1060, 0
        %v1125 = vsel %vm232, %v1061, 0
        %v1128 = vsel %vm232, %v1062, 0
        %v1131 = vsel %vm232, %v1063, 0
        %v1134 = vsel %vm232, %v1064, 0
        %v1137 = vsel %vm232, %v1065, 0
        %v1140 = vsel %vm232, %v1066, 0
        %v1143 = vsel %vm232, %v1067, 0
        %v1146 = vsel %vm232, %v1068, 0
        %v1149 = vsel %vm232, %v1069, 0
        %v1152 = vsel %vm232, %v1070, 0
        %v1155 = vsel %vm232, %v1071, 0
        %v1158 = vsel %vm232, %v1072, 0
        %v1161 = vsel %vm232, %v1073, 0
        %v1164 = vsel %vm232, %v1074, 0
        %v1167 = vsel %vm232, %v1075, 0
        %v1170 = vsel %vm232, %v1076, 0
        %v1173 = vsel %vm232, %v1077, 0
        %v1176 = vsel %vm232, %v1078, 0
        %v1179 = vsel %vm329, %v1081, 0
        %1181 = vmatprep.subr.mxu0 0.0
        %1182 = vmatpush1.msra.mxu0 %v1080
        %1183 = vmatprep.subr.mxu0 0.0
        %1184 = vmatpush1.msra.mxu0 %v1179
        %1185 = vmatprep.subr.mxu0 0.0
        %1186 = vmatpush1.msra.mxu0 0.0
        %1187 = vmatprep.subr.mxu0 0.0
        %1188 = vmatpush1.msra.mxu0 0.0
        %1189 = vmatprep.subr.mxu0 0.0
        %1190 = vmatpush1.msra.mxu0 0.0
        %1191 = vmatprep.subr.mxu0 0.0
        %1192 = vmatpush1.msra.mxu0 0.0
        %1193 = vmatprep.subr.mxu0 0.0
        %1194 = vmatpush1.msra.mxu0 0.0
        %1195 = vmatprep.subr.mxu0 0.0
        %1196 = vmatpush1.msra.mxu0 0.0
        %1197 = vmatprep.subr.mxu0 0.0
        %1198 = vmatpush1.msra.mxu0 0.0
        %1199 = vmatprep.subr.mxu0 0.0
        %1200 = vmatpush1.msra.mxu0 0.0
        %1201 = vmatprep.subr.mxu0 0.0
        %1202 = vmatpush1.msra.mxu0 0.0
        %1203 = vmatprep.subr.mxu0 0.0
        %1204 = vmatpush1.msra.mxu0 0.0
        %1205 = vmatprep.subr.mxu0 0.0
        %1206 = vmatpush1.msra.mxu0 0.0
        %1207 = vmatprep.subr.mxu0 0.0
        %1208 = vmatpush1.msra.mxu0 0.0
        %1209 = vmatprep.subr.mxu0 0.0
        %1210 = vmatpush1.msra.mxu0 0.0
        %1211 = vmatprep.subr.mxu0 0.0
        %1212 = vmatpush1.msra.mxu0 0.0
        %1213 = vmatprep.subr.mxu0 0.0
        %1214 = vmatpush1.msra.mxu0 0.0
        %1215 = vmatprep.subr.mxu0 0.0
        %1216 = vmatpush1.msra.mxu0 0.0
        %1217 = vmatprep.subr.mxu0 0.0
        %1218 = vmatpush1.msra.mxu0 0.0
        %1219 = vmatprep.subr.mxu0 0.0
        %1220 = vmatpush1.msra.mxu0 0.0
        %1221 = vmatprep.subr.mxu0 0.0
        %1222 = vmatpush1.msra.mxu0 0.0
        %1223 = vmatprep.subr.mxu0 0.0
        %1224 = vmatpush1.msra.mxu0 0.0
        %1225 = vmatprep.subr.mxu0 0.0
        %1226 = vmatpush1.msra.mxu0 0.0
        %1227 = vmatprep.subr.mxu0 0.0
        %1228 = vmatpush1.msra.mxu0 0.0
        %1229 = vmatprep.subr.mxu0 0.0
        %1230 = vmatpush1.msra.mxu0 0.0
        %1231 = vmatprep.subr.mxu0 0.0
        %1232 = vmatpush1.msra.mxu0 0.0
        %1233 = vmatprep.subr.mxu0 0.0
        %1234 = vmatpush1.msra.mxu0 0.0
        %1235 = vmatprep.subr.mxu0 0.0
        %1236 = vmatpush1.msra.mxu0 0.0
        %1237 = vmatprep.subr.mxu0 0.0
        %1238 = vmatpush1.msra.mxu0 0.0
        %1239 = vmatprep.subr.mxu0 0.0
        %1240 = vmatpush1.msra.mxu0 0.0
        %1241 = vmatprep.subr.mxu0 0.0
        %1242 = vmatpush1.msra.mxu0 0.0
        %1243 = vmatprep.subr.mxu0 0.0
        %1244 = vmatpush1.msra.mxu0 0.0
        %1245 = vmatprep.mubr.f32.mxu0 0.0
        %1246 = vmatmul.mubr.f32.gmra.mrb[0].mxu0 %v1083
        %v1247 = vpop.f32.mrb[0].mxu0
        %v1248 = vadd.f32 0.0, %v1247
        %v1249 = vpop.f32.mrb[0].mxu0
        %1250 = vmatprep.mubr.f32.mxu0 0.0
        %1251 = vmatmul.mubr.f32.gmra.mrb[0].mxu0 %v1086
        %v1252 = vpop.f32.mrb[0].mxu0
        %v1253 = vadd.f32 0.0, %v1252
        %v1254 = vpop.f32.mrb[0].mxu0
        %1255 = vmatprep.mubr.f32.mxu0 0.0
        %1256 = vmatmul.mubr.f32.gmra.mrb[0].mxu0 %v1089
        %v1257 = vpop.f32.mrb[0].mxu0
        %v1258 = vadd.f32 0.0, %v1257
        %v1259 = vpop.f32.mrb[0].mxu0
        %1260 = vmatprep.mubr.f32.mxu0 0.0
        %1261 = vmatmul.mubr.f32.gmra.mrb[0].mxu0 %v1092
        %v1262 = vpop.f32.mrb[0].mxu0
        %v1263 = vadd.f32 0.0, %v1262
        %v1264 = vpop.f32.mrb[0].mxu0
        %1265 = vmatprep.mubr.f32.mxu0 0.0
        %1266 = vmatmul.mubr.f32.gmra.mrb[0].mxu0 %v1095
        %v1267 = vpop.f32.mrb[0].mxu0
        %v1268 = vadd.f32 0.0, %v1267
        %v1269 = vpop.f32.mrb[0].mxu0
        %1270 = vmatprep.mubr.f32.mxu0 0.0
        %1271 = vmatmul.mubr.f32.gmra.mrb[0].mxu0 %v1098
        %v1272 = vpop.f32.mrb[0].mxu0
        %v1273 = vadd.f32 0.0, %v1272
        %v1274 = vpop.f32.mrb[0].mxu0
        %1275 = vmatprep.mubr.f32.mxu0 0.0
        %1276 = vmatmul.mubr.f32.gmra.mrb[0].mxu0 %v1101
        %v1277 = vpop.f32.mrb[0].mxu0
        %v1278 = vadd.f32 0.0, %v1277
        %v1279 = vpop.f32.mrb[0].mxu0
        %1280 = vmatprep.mubr.f32.mxu0 0.0
        %1281 = vmatmul.mubr.f32.gmra.mrb[0].mxu0 %v1104
        %v1282 = vpop.f32.mrb[0].mxu0
        %v1283 = vadd.f32 0.0, %v1282
        %v1284 = vpop.f32.mrb[0].mxu0
        %1285 = vmatprep.mubr.f32.mxu0 0.0
        %1286 = vmatmul.mubr.f32.gmra.mrb[0].mxu0 %v1107
        %v1287 = vpop.f32.mrb[0].mxu0
        %v1288 = vadd.f32 0.0, %v1287
        %v1289 = vpop.f32.mrb[0].mxu0
        %1290 = vmatprep.mubr.f32.mxu0 0.0
        %1291 = vmatmul.mubr.f32.gmra.mrb[0].mxu0 %v1110
        %v1292 = vpop.f32.mrb[0].mxu0
        %v1293 = vadd.f32 0.0, %v1292
        %v1294 = vpop.f32.mrb[0].mxu0
        %1295 = vmatprep.mubr.f32.mxu0 0.0
        %1296 = vmatmul.mubr.f32.gmra.mrb[0].mxu0 %v1113
        %v1297 = vpop.f32.mrb[0].mxu0
        %v1298 = vadd.f32 0.0, %v1297
        %v1299 = vpop.f32.mrb[0].mxu0
        %1300 = vmatprep.mubr.f32.mxu0 0.0
        %1301 = vmatmul.mubr.f32.gmra.mrb[0].mxu0 %v1116
        %v1302 = vpop.f32.mrb[0].mxu0
        %v1303 = vadd.f32 0.0, %v1302
        %v1304 = vpop.f32.mrb[0].mxu0
        %1305 = vmatprep.mubr.f32.mxu0 0.0
        %1306 = vmatmul.mubr.f32.gmra.mrb[0].mxu0 %v1119
        %v1307 = vpop.f32.mrb[0].mxu0
        %v1308 = vadd.f32 0.0, %v1307
        %v1309 = vpop.f32.mrb[0].mxu0
        %1310 = vmatprep.mubr.f32.mxu0 0.0
        %1311 = vmatmul.mubr.f32.gmra.mrb[0].mxu0 %v1122
        %v1312 = vpop.f32.mrb[0].mxu0
        %v1313 = vadd.f32 0.0, %v1312
        %v1314 = vpop.f32.mrb[0].mxu0
        %1315 = vmatprep.mubr.f32.mxu0 0.0
        %1316 = vmatmul.mubr.f32.gmra.mrb[0].mxu0 %v1125
        %v1317 = vpop.f32.mrb[0].mxu0
        %v1318 = vadd.f32 0.0, %v1317
        %v1319 = vpop.f32.mrb[0].mxu0
        %1320 = vmatprep.mubr.f32.mxu0 0.0
        %1321 = vmatmul.mubr.f32.gmra.mrb[0].mxu0 %v1128
        %v1322 = vpop.f32.mrb[0].mxu0
        %v1323 = vadd.f32 0.0, %v1322
        %v1324 = vpop.f32.mrb[0].mxu0
        %1325 = vmatprep.mubr.f32.mxu0 0.0
        %1326 = vmatmul.mubr.f32.gmra.mrb[0].mxu0 %v1131
        %v1327 = vpop.f32.mrb[0].mxu0
        %v1328 = vadd.f32 0.0, %v1327
        %v1329 = vpop.f32.mrb[0].mxu0
        %1330 = vmatprep.mubr.f32.mxu0 0.0
        %1331 = vmatmul.mubr.f32.gmra.mrb[0].mxu0 %v1134
        %v1332 = vpop.f32.mrb[0].mxu0
        %v1333 = vadd.f32 0.0, %v1332
        %v1334 = vpop.f32.mrb[0].mxu0
        %1335 = vmatprep.mubr.f32.mxu0 0.0
        %1336 = vmatmul.mubr.f32.gmra.mrb[0].mxu0 %v1137
        %v1337 = vpop.f32.mrb[0].mxu0
        %v1338 = vadd.f32 0.0, %v1337
        %v1339 = vpop.f32.mrb[0].mxu0
        %1340 = vmatprep.mubr.f32.mxu0 0.0
        %1341 = vmatmul.mubr.f32.gmra.mrb[0].mxu0 %v1140
        %v1342 = vpop.f32.mrb[0].mxu0
        %v1343 = vadd.f32 0.0, %v1342
        %v1344 = vpop.f32.mrb[0].mxu0
        %1345 = vmatprep.mubr.f32.mxu0 0.0
        %1346 = vmatmul.mubr.f32.gmra.mrb[0].mxu0 %v1143
        %v1347 = vpop.f32.mrb[0].mxu0
        %v1348 = vadd.f32 0.0, %v1347
        %v1349 = vpop.f32.mrb[0].mxu0
        %1350 = vmatprep.mubr.f32.mxu0 0.0
        %1351 = vmatmul.mubr.f32.gmra.mrb[0].mxu0 %v1146
        %v1352 = vpop.f32.mrb[0].mxu0
        %v1353 = vadd.f32 0.0, %v1352
        %v1354 = vpop.f32.mrb[0].mxu0
        %1355 = vmatprep.mubr.f32.mxu0 0.0
        %1356 = vmatmul.mubr.f32.gmra.mrb[0].mxu0 %v1149
        %v1357 = vpop.f32.mrb[0].mxu0
        %v1358 = vadd.f32 0.0, %v1357
        %v1359 = vpop.f32.mrb[0].mxu0
        %1360 = vmatprep.mubr.f32.mxu0 0.0
        %1361 = vmatmul.mubr.f32.gmra.mrb[0].mxu0 %v1152
        %v1362 = vpop.f32.mrb[0].mxu0
        %v1363 = vadd.f32 0.0, %v1362
        %v1364 = vpop.f32.mrb[0].mxu0
        %1365 = vmatprep.mubr.f32.mxu0 0.0
        %1366 = vmatmul.mubr.f32.gmra.mrb[0].mxu0 %v1155
        %v1367 = vpop.f32.mrb[0].mxu0
        %v1368 = vadd.f32 0.0, %v1367
        %v1369 = vpop.f32.mrb[0].mxu0
        %1370 = vmatprep.mubr.f32.mxu0 0.0
        %1371 = vmatmul.mubr.f32.gmra.mrb[0].mxu0 %v1158
        %v1372 = vpop.f32.mrb[0].mxu0
        %v1373 = vadd.f32 0.0, %v1372
        %v1374 = vpop.f32.mrb[0].mxu0
        %1375 = vmatprep.mubr.f32.mxu0 0.0
        %1376 = vmatmul.mubr.f32.gmra.mrb[0].mxu0 %v1161
        %v1377 = vpop.f32.mrb[0].mxu0
        %v1378 = vadd.f32 0.0, %v1377
        %v1379 = vpop.f32.mrb[0].mxu0
        %1380 = vmatprep.mubr.f32.mxu0 0.0
        %1381 = vmatmul.mubr.f32.gmra.mrb[0].mxu0 %v1164
        %v1382 = vpop.f32.mrb[0].mxu0
        %v1383 = vadd.f32 0.0, %v1382
        %v1384 = vpop.f32.mrb[0].mxu0
        %1385 = vmatprep.mubr.f32.mxu0 0.0
        %1386 = vmatmul.mubr.f32.gmra.mrb[0].mxu0 %v1167
        %v1387 = vpop.f32.mrb[0].mxu0
        %v1388 = vadd.f32 0.0, %v1387
        %v1389 = vpop.f32.mrb[0].mxu0
        %1390 = vmatprep.mubr.f32.mxu0 0.0
        %1391 = vmatmul.mubr.f32.gmra.mrb[0].mxu0 %v1170
        %v1392 = vpop.f32.mrb[0].mxu0
        %v1393 = vadd.f32 0.0, %v1392
        %v1394 = vpop.f32.mrb[0].mxu0
        %1395 = vmatprep.mubr.f32.mxu0 0.0
        %1396 = vmatmul.mubr.f32.gmra.mrb[0].mxu0 %v1173
        %v1397 = vpop.f32.mrb[0].mxu0
        %v1398 = vadd.f32 0.0, %v1397
        %v1399 = vpop.f32.mrb[0].mxu0
        %1400 = vmatprep.mubr.f32.mxu0 0.0
        %1401 = vmatmul.mubr.f32.gmra.mrb[0].mxu0 %v1176
        %v1402 = vpop.f32.mrb[0].mxu0
        %v1403 = vadd.f32 0.0, %v1402
        %v1404 = vpop.f32.mrb[0].mxu0
        %1405 = vdwg.mxu0
        %v1406 = vld [vmem:[#allocation2] sm:$0xff]
        %v1407 = vld [vmem:[#allocation2 + $0x8] sm:$0xff]
        %v1408 = vld [vmem:[#allocation2 + $0x10] sm:$0xff]
        %v1409 = vld [vmem:[#allocation2 + $0x18] sm:$0xff]
        %v1410 = vld [vmem:[#allocation2 + $0x20] sm:$0xff]
        %v1411 = vld [vmem:[#allocation2 + $0x28] sm:$0xff]
        %v1412 = vld [vmem:[#allocation2 + $0x30] sm:$0xff]
        %v1413 = vld [vmem:[#allocation2 + $0x38] sm:$0xff]
        %v1414 = vld [vmem:[#allocation2 + $0x40] sm:$0xff]
        %v1415 = vld [vmem:[#allocation2 + $0x48] sm:$0xff]
        %v1416 = vld [vmem:[#allocation2 + $0x50] sm:$0xff]
        %v1417 = vld [vmem:[#allocation2 + $0x58] sm:$0xff]
        %v1418 = vld [vmem:[#allocation2 + $0x60] sm:$0xff]
        %v1419 = vld [vmem:[#allocation2 + $0x68] sm:$0xff]
        %v1420 = vld [vmem:[#allocation2 + $0x70] sm:$0xff]
        %v1421 = vld [vmem:[#allocation2 + $0x78] sm:$0xff]
        %v1422 = vld [vmem:[#allocation2 + $0x80] sm:$0xff]
        %v1423 = vld [vmem:[#allocation2 + $0x88] sm:$0xff]
        %v1424 = vld [vmem:[#allocation2 + $0x90] sm:$0xff]
        %v1425 = vld [vmem:[#allocation2 + $0x98] sm:$0xff]
        %v1426 = vld [vmem:[#allocation2 + $0xa0] sm:$0xff]
        %v1427 = vld [vmem:[#allocation2 + $0xa8] sm:$0xff]
        %v1428 = vld [vmem:[#allocation2 + $0xb0] sm:$0xff]
        %v1429 = vld [vmem:[#allocation2 + $0xb8] sm:$0xff]
        %v1430 = vld [vmem:[#allocation2 + $0xc0] sm:$0xff]
        %v1431 = vld [vmem:[#allocation2 + $0xc8] sm:$0xff]
        %v1432 = vld [vmem:[#allocation2 + $0xd0] sm:$0xff]
        %v1433 = vld [vmem:[#allocation2 + $0xd8] sm:$0xff]
        %v1434 = vld [vmem:[#allocation2 + $0xe0] sm:$0xff]
        %v1435 = vld [vmem:[#allocation2 + $0xe8] sm:$0xff]
        %v1436 = vld [vmem:[#allocation2 + $0xf0] sm:$0xff]
        %v1437 = vld [vmem:[#allocation2 + $0xf8] sm:$0xff]
        %v1438 = vadd.f32 %v1406, %v1248
        %v1439 = vadd.f32 %v1407, %v1253
        %v1440 = vadd.f32 %v1408, %v1258
        %v1441 = vadd.f32 %v1409, %v1263
        %v1442 = vadd.f32 %v1410, %v1268
        %v1443 = vadd.f32 %v1411, %v1273
        %v1444 = vadd.f32 %v1412, %v1278
        %v1445 = vadd.f32 %v1413, %v1283
        %v1446 = vadd.f32 %v1414, %v1288
        %v1447 = vadd.f32 %v1415, %v1293
        %v1448 = vadd.f32 %v1416, %v1298
        %v1449 = vadd.f32 %v1417, %v1303
        %v1450 = vadd.f32 %v1418, %v1308
        %v1451 = vadd.f32 %v1419, %v1313
        %v1452 = vadd.f32 %v1420, %v1318
        %v1453 = vadd.f32 %v1421, %v1323
        %v1454 = vadd.f32 %v1422, %v1328
        %v1455 = vadd.f32 %v1423, %v1333
        %v1456 = vadd.f32 %v1424, %v1338
        %v1457 = vadd.f32 %v1425, %v1343
        %v1458 = vadd.f32 %v1426, %v1348
        %v1459 = vadd.f32 %v1427, %v1353
        %v1460 = vadd.f32 %v1428, %v1358
        %v1461 = vadd.f32 %v1429, %v1363
        %v1462 = vadd.f32 %v1430, %v1368
        %v1463 = vadd.f32 %v1431, %v1373
        %v1464 = vadd.f32 %v1432, %v1378
        %v1465 = vadd.f32 %v1433, %v1383
        %v1466 = vadd.f32 %v1434, %v1388
        %v1467 = vadd.f32 %v1435, %v1393
        %v1468 = vadd.f32 %v1436, %v1398
        %v1469 = vadd.f32 %v1437, %v1403
        %1470 = vst [vmem:[#allocation2] sm:$0xff] %v1438
        %1471 = vst [vmem:[#allocation2 + $0x8] sm:$0xff] %v1439
        %1472 = vst [vmem:[#allocation2 + $0x10] sm:$0xff] %v1440
        %1473 = vst [vmem:[#allocation2 + $0x18] sm:$0xff] %v1441
        %1474 = vst [vmem:[#allocation2 + $0x20] sm:$0xff] %v1442
        %1475 = vst [vmem:[#allocation2 + $0x28] sm:$0xff] %v1443
        %1476 = vst [vmem:[#allocation2 + $0x30] sm:$0xff] %v1444
        %1477 = vst [vmem:[#allocation2 + $0x38] sm:$0xff] %v1445
        %1478 = vst [vmem:[#allocation2 + $0x40] sm:$0xff] %v1446
        %1479 = vst [vmem:[#allocation2 + $0x48] sm:$0xff] %v1447
        %1480 = vst [vmem:[#allocation2 + $0x50] sm:$0xff] %v1448
        %1481 = vst [vmem:[#allocation2 + $0x58] sm:$0xff] %v1449
        %1482 = vst [vmem:[#allocation2 + $0x60] sm:$0xff] %v1450
        %1483 = vst [vmem:[#allocation2 + $0x68] sm:$0xff] %v1451
        %1484 = vst [vmem:[#allocation2 + $0x70] sm:$0xff] %v1452
        %1485 = vst [vmem:[#allocation2 + $0x78] sm:$0xff] %v1453
        %1486 = vst [vmem:[#allocation2 + $0x80] sm:$0xff] %v1454
        %1487 = vst [vmem:[#allocation2 + $0x88] sm:$0xff] %v1455
        %1488 = vst [vmem:[#allocation2 + $0x90] sm:$0xff] %v1456
        %1489 = vst [vmem:[#allocation2 + $0x98] sm:$0xff] %v1457
        %1490 = vst [vmem:[#allocation2 + $0xa0] sm:$0xff] %v1458
        %1491 = vst [vmem:[#allocation2 + $0xa8] sm:$0xff] %v1459
        %1492 = vst [vmem:[#allocation2 + $0xb0] sm:$0xff] %v1460
        %1493 = vst [vmem:[#allocation2 + $0xb8] sm:$0xff] %v1461
        %1494 = vst [vmem:[#allocation2 + $0xc0] sm:$0xff] %v1462
        %1495 = vst [vmem:[#allocation2 + $0xc8] sm:$0xff] %v1463
        %1496 = vst [vmem:[#allocation2 + $0xd0] sm:$0xff] %v1464
        %1497 = vst [vmem:[#allocation2 + $0xd8] sm:$0xff] %v1465
        %1498 = vst [vmem:[#allocation2 + $0xe0] sm:$0xff] %v1466
        %1499 = vst [vmem:[#allocation2 + $0xe8] sm:$0xff] %v1467
        %1500 = vst [vmem:[#allocation2 + $0xf0] sm:$0xff] %v1468
        %1501 = vst [vmem:[#allocation2 + $0xf8] sm:$0xff] %v1469
        %v1502 = vld [vmem:[#allocation2] sm:$0xff]
        %v1503 = vld [vmem:[#allocation2 + $0x8] sm:$0xff]
        %v1504 = vld [vmem:[#allocation2 + $0x10] sm:$0xff]
        %v1505 = vld [vmem:[#allocation2 + $0x18] sm:$0xff]
        %v1506 = vld [vmem:[#allocation2 + $0x20] sm:$0xff]
        %v1507 = vld [vmem:[#allocation2 + $0x28] sm:$0xff]
        %v1508 = vld [vmem:[#allocation2 + $0x30] sm:$0xff]
        %v1509 = vld [vmem:[#allocation2 + $0x38] sm:$0xff]
        %v1510 = vld [vmem:[#allocation2 + $0x40] sm:$0xff]
        %v1511 = vld [vmem:[#allocation2 + $0x48] sm:$0xff]
        %v1512 = vld [vmem:[#allocation2 + $0x50] sm:$0xff]
        %v1513 = vld [vmem:[#allocation2 + $0x58] sm:$0xff]
        %v1514 = vld [vmem:[#allocation2 + $0x60] sm:$0xff]
        %v1515 = vld [vmem:[#allocation2 + $0x68] sm:$0xff]
        %v1516 = vld [vmem:[#allocation2 + $0x70] sm:$0xff]
        %v1517 = vld [vmem:[#allocation2 + $0x78] sm:$0xff]
        %v1518 = vld [vmem:[#allocation2 + $0x80] sm:$0xff]
        %v1519 = vld [vmem:[#allocation2 + $0x88] sm:$0xff]
        %v1520 = vld [vmem:[#allocation2 + $0x90] sm:$0xff]
        %v1521 = vld [vmem:[#allocation2 + $0x98] sm:$0xff]
        %v1522 = vld [vmem:[#allocation2 + $0xa0] sm:$0xff]
        %v1523 = vld [vmem:[#allocation2 + $0xa8] sm:$0xff]
        %v1524 = vld [vmem:[#allocation2 + $0xb0] sm:$0xff]
        %v1525 = vld [vmem:[#allocation2 + $0xb8] sm:$0xff]
        %v1526 = vld [vmem:[#allocation2 + $0xc0] sm:$0xff]
        %v1527 = vld [vmem:[#allocation2 + $0xc8] sm:$0xff]
        %v1528 = vld [vmem:[#allocation2 + $0xd0] sm:$0xff]
        %v1529 = vld [vmem:[#allocation2 + $0xd8] sm:$0xff]
        %v1530 = vld [vmem:[#allocation2 + $0xe0] sm:$0xff]
        %v1531 = vld [vmem:[#allocation2 + $0xe8] sm:$0xff]
        %v1532 = vld [vmem:[#allocation2 + $0xf0] sm:$0xff]
        %v1533 = vld [vmem:[#allocation2 + $0xf8] sm:$0xff]
        %v1534 = vld [vmem:[%s2] sm:$0x1]
        %v1536 = vlaneseq
        %v1537 = vshrl.u32 %v1536, 7
        %v1538 = vsub.s32 0, %v1537
        %v1539 = vrot.slane %v1534, %v1538
        %v1541 = vadd.f32 %v1502, %v1539
        %v1542 = vadd.f32 %v1503, %v1539
        %v1543 = vadd.f32 %v1504, %v1539
        %v1544 = vadd.f32 %v1505, %v1539
        %v1545 = vadd.f32 %v1506, %v1539
        %v1546 = vadd.f32 %v1507, %v1539
        %v1547 = vadd.f32 %v1508, %v1539
        %v1548 = vadd.f32 %v1509, %v1539
        %v1549 = vadd.f32 %v1510, %v1539
        %v1550 = vadd.f32 %v1511, %v1539
        %v1551 = vadd.f32 %v1512, %v1539
        %v1552 = vadd.f32 %v1513, %v1539
        %v1553 = vadd.f32 %v1514, %v1539
        %v1554 = vadd.f32 %v1515, %v1539
        %v1555 = vadd.f32 %v1516, %v1539
        %v1556 = vadd.f32 %v1517, %v1539
        %v1557 = vadd.f32 %v1518, %v1539
        %v1558 = vadd.f32 %v1519, %v1539
        %v1559 = vadd.f32 %v1520, %v1539
        %v1560 = vadd.f32 %v1521, %v1539
        %v1561 = vadd.f32 %v1522, %v1539
        %v1562 = vadd.f32 %v1523, %v1539
        %v1563 = vadd.f32 %v1524, %v1539
        %v1564 = vadd.f32 %v1525, %v1539
        %v1565 = vadd.f32 %v1526, %v1539
        %v1566 = vadd.f32 %v1527, %v1539
        %v1567 = vadd.f32 %v1528, %v1539
        %v1568 = vadd.f32 %v1529, %v1539
        %v1569 = vadd.f32 %v1530, %v1539
        %v1570 = vadd.f32 %v1531, %v1539
        %v1571 = vadd.f32 %v1532, %v1539
        %v1572 = vadd.f32 %v1533, %v1539
        %v1573 = vmax.f32 %v1541, 0.0
        %v1574 = vmax.f32 %v1542, 0.0
        %v1575 = vmax.f32 %v1543, 0.0
        %v1576 = vmax.f32 %v1544, 0.0
        %v1577 = vmax.f32 %v1545, 0.0
        %v1578 = vmax.f32 %v1546, 0.0
        %v1579 = vmax.f32 %v1547, 0.0
        %v1580 = vmax.f32 %v1548, 0.0
        %v1581 = vmax.f32 %v1549, 0.0
        %v1582 = vmax.f32 %v1550, 0.0
        %v1583 = vmax.f32 %v1551, 0.0
        %v1584 = vmax.f32 %v1552, 0.0
        %v1585 = vmax.f32 %v1553, 0.0
        %v1586 = vmax.f32 %v1554, 0.0
        %v1587 = vmax.f32 %v1555, 0.0
        %v1588 = vmax.f32 %v1556, 0.0
        %v1589 = vmax.f32 %v1557, 0.0
        %v1590 = vmax.f32 %v1558, 0.0
        %v1591 = vmax.f32 %v1559, 0.0
        %v1592 = vmax.f32 %v1560, 0.0
        %v1593 = vmax.f32 %v1561, 0.0
        %v1594 = vmax.f32 %v1562, 0.0
        %v1595 = vmax.f32 %v1563, 0.0
        %v1596 = vmax.f32 %v1564, 0.0
        %v1597 = vmax.f32 %v1565, 0.0
        %v1598 = vmax.f32 %v1566, 0.0
        %v1599 = vmax.f32 %v1567, 0.0
        %v1600 = vmax.f32 %v1568, 0.0
        %v1601 = vmax.f32 %v1569, 0.0
        %v1602 = vmax.f32 %v1570, 0.0
        %v1603 = vmax.f32 %v1571, 0.0
        %v1604 = vmax.f32 %v1572, 0.0
        %1605 = vst [vmem:[%s187] sm:$0xff] %v1573
        %1606 = vst [vmem:[%s187 + $0x8] sm:$0xff] %v1574
        %1607 = vst [vmem:[%s187 + $0x10] sm:$0xff] %v1575
        %1608 = vst [vmem:[%s187 + $0x18] sm:$0xff] %v1576
        %1609 = vst [vmem:[%s187 + $0x20] sm:$0xff] %v1577
        %1610 = vst [vmem:[%s187 + $0x28] sm:$0xff] %v1578
        %1611 = vst [vmem:[%s187 + $0x30] sm:$0xff] %v1579
        %1612 = vst [vmem:[%s187 + $0x38] sm:$0xff] %v1580
        %1613 = vst [vmem:[%s187 + $0x40] sm:$0xff] %v1581
        %1614 = vst [vmem:[%s187 + $0x48] sm:$0xff] %v1582
        %1615 = vst [vmem:[%s187 + $0x50] sm:$0xff] %v1583
        %1616 = vst [vmem:[%s187 + $0x58] sm:$0xff] %v1584
        %1617 = vst [vmem:[%s187 + $0x60] sm:$0xff] %v1585
        %1618 = vst [vmem:[%s187 + $0x68] sm:$0xff] %v1586
        %1619 = vst [vmem:[%s187 + $0x70] sm:$0xff] %v1587
        %1620 = vst [vmem:[%s187 + $0x78] sm:$0xff] %v1588
        %1621 = vst [vmem:[%s187 + $0x80] sm:$0xff] %v1589
        %1622 = vst [vmem:[%s187 + $0x88] sm:$0xff] %v1590
        %1623 = vst [vmem:[%s187 + $0x90] sm:$0xff] %v1591
        %1624 = vst [vmem:[%s187 + $0x98] sm:$0xff] %v1592
        %1625 = vst [vmem:[%s187 + $0xa0] sm:$0xff] %v1593
        %1626 = vst [vmem:[%s187 + $0xa8] sm:$0xff] %v1594
        %1627 = vst [vmem:[%s187 + $0xb0] sm:$0xff] %v1595
        %1628 = vst [vmem:[%s187 + $0xb8] sm:$0xff] %v1596
        %1629 = vst [vmem:[%s187 + $0xc0] sm:$0xff] %v1597
        %1630 = vst [vmem:[%s187 + $0xc8] sm:$0xff] %v1598
        %1631 = vst [vmem:[%s187 + $0xd0] sm:$0xff] %v1599
        %1632 = vst [vmem:[%s187 + $0xd8] sm:$0xff] %v1600
        %1633 = vst [vmem:[%s187 + $0xe0] sm:$0xff] %v1601
        %1634 = vst [vmem:[%s187 + $0xe8] sm:$0xff] %v1602
        %1635 = vst [vmem:[%s187 + $0xf0] sm:$0xff] %v1603
        %1636 = vst [vmem:[%s187 + $0xf8] sm:$0xff] %v1604
        %s1637 = sand.u32 %s109, 1
        %s1638 = scalar_lea.sflag [#allocation4], %s1637
        %s1639 = sand.u32 %s109, 1
        %s1640 = smul.addr %s1639, 256
        %s1641 = scalar_lea.vmem [#allocation3], %s1640
        // Predicated region
        $region33: #{tpu_custom_call.1} parent=31 // pred_check
          %p1642 = pneg %p119
        $region34: #{tpu_custom_call.1} parent=31 // pred_check_branch
          %1644 = sbr.rel (%p1642) target = $region36
        $region35: #{tpu_custom_call.1} parent=31 // pred_region
          %s1645 = smul.u32 16, %s22
          %s1647 = ssub.s32 4096, 4096
          %1648 = vsyncadd %s1638, %s1647
          %s1649 = smul.addr %s1645, 2
          %s1650 = smul.addr %s21, 32
          %s1651 = sadd.s32 %s1649, %s1650
          %s1652 = smul.addr %s1651, 128
          %s1653 = scalar_lea.hbm %s3, %s1652
          %s1654 = sshll.u32 %s1641, 4
          %s1655 = int_to_ptr.vmem [resolvable:$true] %s1654
          %1660 = dma.vmem_to_hbm [thread:$0]  %s1655, 4096, %s1653, %s1638, 128, 128, 8
        $region36: #{tpu_custom_call.1} parent=31 // pred_fallthru
          _
      $region32: #{tpu_custom_call.1} parent=5 // pred_fallthru
        _
      %p1661 = scmp.le.s32.totalorder 2, %s12
      // Predicated region
      $region37: #{tpu_custom_call.1} parent=5 // pred_check
        %p1662 = pneg %p1661
      $region38: #{tpu_custom_call.1} parent=5 // pred_check_branch
        %1664 = sbr.rel (%p1662) target = $region40
      $region39: #{tpu_custom_call.1} parent=5 // pred_region
        %s1665 = ssub.s32 %s12, 2
        // Predicated region
        $region41: #{tpu_custom_call.1} parent=39 // pred_check
          %p1666 = pneg %p125
        $region42: #{tpu_custom_call.1} parent=39 // pred_check_branch
          %1668 = sbr.rel (%p1666) target = $region44
        $region43: #{tpu_custom_call.1} parent=39 // pred_region
          %s1669 = sand.u32 %s110, 1
          %s1670 = scalar_lea.sflag [#allocation4], %s1669
          %s1671 = sand.u32 %s110, 1
          %s1672 = smul.addr %s1671, 256
          %s1673 = scalar_lea.vmem [#allocation3], %s1672
          %1674 = dma.done %s1670, 4096
        $region44: #{tpu_custom_call.1} parent=39 // pred_fallthru
          _
      $region40: #{tpu_custom_call.1} parent=5 // pred_fallthru
        _
    $region6: #{tpu_custom_call.1} parent=1 // loop_footer
      %s16 = sadd.s32 1, %s12
    $region7: #{tpu_custom_call.1} parent=1 // loop_footer_branch
      %11 = sbr.rel target = $region3
    $region8: #{tpu_custom_call.1} parent=1 // loop_exit
      _
    %1675 = vsyncpa [#allocation4], 1
    %s1676 = scalar_lea.sflag [#allocation4], 1
    %1677 = vsyncpa %s1676, 1

</llo_original>
